<compile_context>
chip_gen: v6e
topology: v6e:2x2x1
jax: 0.10.0
libtpu: 0.0.40
codegen_flags: <defaults>
</compile_context>

<pallas_src>
import math

import jax
import jax.numpy as jnp
from jax.experimental import pallas as pl
from jax.experimental.pallas import tpu as pltpu


# ----------------------------------------------------------------------------
# Pallas kernel: FMBlock forward for one tile of TN tokens.
# ----------------------------------------------------------------------------
def fm_block_kernel(slab_ref, feat_ref,
                    bmat_ref, xpb_ref,
                    w1sc_ref, w1f_ref, b1_ref,
                    w2_ref, b2_ref, w3_ref, b3_ref,
                    w4_ref, b4_ref, w5_ref, b5_ref,
                    wp_h_ref, wp_sc_ref, bp_ref,
                    scal_ref, out_ref):
    # scal_ref (SMEM, (5,)): [prelu_a1..prelu_a5]
    din = out_ref.shape[-1]

    slab = slab_ref[...]                       # (TN, Din+1) f32: [input | og]
    x_in = slab[:, :din]                       # (TN, Din)
    og = slab[:, din:din + 1]                  # (TN, 1) = omega * tanh((slider-1)*gain_out)

    # --- RFF2: input affine, 2*pi scale AND the cos phase-shift are pre-folded, so a
    #     single sin over (TN, E) produces [sin | cos] directly ---
    xp = jnp.dot(x_in, bmat_ref[...], preferred_element_type=jnp.float32) + xpb_ref[...]
    sincos = jnp.sin(xp)                       # (TN, E) = [sin(xp) | cos(xp)]
    sincos_b = sincos.astype(jnp.bfloat16)

    feat_b = feat_ref[...]                     # (TN, F) bf16; tanh(gain_in) folded into w1_feat

    # --- tmlp layer 1 (concat-free: split weight rows; [sin|cos] rows merged) ---
    y = (jnp.dot(sincos_b, w1sc_ref[...], preferred_element_type=jnp.float32)
         + jnp.dot(feat_b, w1f_ref[...], preferred_element_type=jnp.float32)
         + b1_ref[...])
    h = jnp.where(y >= 0.0, y, scal_ref[0] * y).astype(jnp.bfloat16)

    # --- tmlp layers 2..5: bf16 activations between layers (f32 accumulate on MXU) ---
    def lin_prelu(hh, w_ref, b_ref, alpha):
        yy = jnp.dot(hh, w_ref[...], preferred_element_type=jnp.float32) + b_ref[...]
        return jnp.where(yy >= 0.0, yy, alpha * yy).astype(jnp.bfloat16)

    h = lin_prelu(h, w2_ref, b2_ref, scal_ref[1])
    h = lin_prelu(h, w3_ref, b3_ref, scal_ref[2])
    h = lin_prelu(h, w4_ref, b4_ref, scal_ref[3])
    h = lin_prelu(h, w5_ref, b5_ref, scal_ref[4])          # (TN, F) bf16

    # --- proj + GLU: both halves live in one (TN, 2*Din) result; static lane slices ---
    pr = (jnp.dot(h, wp_h_ref[...], preferred_element_type=jnp.float32)
          + jnp.dot(sincos_b, wp_sc_ref[...], preferred_element_type=jnp.float32)
          + bp_ref[...])                                   # (TN, 2*Din)
    a = pr[:, :din]
    b = pr[:, din:]
    glu = a * jax.nn.sigmoid(b)                            # (TN, Din)

    # --- gated residual (gate pre-folded into og) ---
    out_ref[...] = x_in + og * glu


# ----------------------------------------------------------------------------
# Wrapper: token tiling + resident weights
# ----------------------------------------------------------------------------
def _round_up(x, m):
    return ((x + m - 1) // m) * m


_WEIGHT_ORDER = ("bmat", "xp_bias", "w1_sc", "w1_feat", "b1",
                 "w2", "b2", "w3", "b3", "w4", "b4", "w5", "b5",
                 "wp_h", "wp_sc", "bp")


def fm_block(kp, inp, feature, slider, omega, *, tile_tokens=2048):
    B, T, Din = inp.shape
    Fdim = feature.shape[-1]
    N = B * T

    # Gate precomputed on the wrapper side (fused by XLA into the slab concat):
    # og = omega * tanh((slider - 1) * gain_out). One lane-dense slab column instead of
    # two lane-sparse side inputs plus an in-kernel tanh.
    og = omega * jnp.tanh((slider - 1.0) * kp["gain_out"])
    slab = jnp.concatenate(
        [inp.reshape(N, Din), og.reshape(N, 1)], axis=-1).astype(jnp.float32)  # (N, Din+1)
    # Feature stream in bf16: kernel consumes bf16 anyway; halves the dominant HBM stream.
    feat = feature.reshape(N, Fdim).astype(jnp.bfloat16)

    TN = min(tile_tokens, _round_up(N, 8))
    # Keep >= 2 grid steps when there is enough work so both v7x TensorCores get a share.
    if N >= 512 and _round_up(N, TN) // TN < 2:
        TN = _round_up(-(-N // 2), 8)
    N_pad = _round_up(N, TN)
    if N_pad != N:
        slab = jnp.pad(slab, ((0, N_pad - N), (0, 0)))
        feat = jnp.pad(feat, ((0, N_pad - N), (0, 0)))

    grid = (N_pad // TN,)

    def tok(c):
        return pl.BlockSpec((TN, c), lambda i: (i, 0))

    def resident(a):
        return pl.BlockSpec(a.shape, lambda i: (0,) * a.ndim)

    smem = pl.BlockSpec(memory_space=pltpu.MemorySpace.SMEM)
    weights = [kp[name] for name in _WEIGHT_ORDER]

    out = pl.pallas_call(
        fm_block_kernel,
        out_shape=jax.ShapeDtypeStruct((N_pad, Din), jnp.float32),
        grid=grid,
        in_specs=[tok(Din + 1), tok(Fdim)] + [resident(w) for w in weights] + [smem],
        out_specs=pl.BlockSpec((TN, Din), lambda i: (i, 0)),
        compiler_params=pltpu.CompilerParams(
            dimension_semantics=("parallel",),
            vmem_limit_bytes=32 * 1024 * 1024),
    )(slab, feat, *weights, kp["scalars"])

    return out[:N].reshape(B, T, Din)


# ----------------------------------------------------------------------------
# Raw (PyTorch-equivalent) parameters + one-time kernel preprocessing
# ----------------------------------------------------------------------------
def init_params(key, input_dim, embed_dim, num_features):
    half = embed_dim // 2
    F = embed_dim * num_features
    concat = F + embed_dim
    keys = jax.random.split(key, 7)

    def linear(k, fan_in, fan_out):
        kw, kb = jax.random.split(k)
        lim = 1.0 / math.sqrt(fan_in)
        w = jax.random.uniform(kw, (fan_in, fan_out), jnp.float32, -lim, lim)
        b = jax.random.uniform(kb, (1, fan_out), jnp.float32, -lim, lim)
        return w, b

    # RFF2(input_dim, embed_dim//2): N = ones / input_dim / half, e = 1.0
    n_mat = jnp.ones((input_dim, half), jnp.float32) / input_dim / half

    w1, b1 = linear(keys[0], concat, F)
    w2, b2 = linear(keys[1], F, F)
    w3, b3 = linear(keys[2], F, F)
    w4, b4 = linear(keys[3], F, F)
    w5, b5 = linear(keys[4], F, F)
    wp, bp = linear(keys[5], concat, 2 * input_dim)
    gain_in = jax.random.normal(keys[6], (num_features,), jnp.float32) / 2.0

    return dict(N=n_mat, e=jnp.float32(1.0),
                w1=w1, b1=b1, w2=w2, b2=b2, w3=w3, b3=b3,
                w4=w4, b4=b4, w5=w5, b5=b5, wp=wp, bp=bp,
                gain_in=gain_in, gain_out=jnp.array([0.1], jnp.float32),
                alphas=jnp.full((5,), 0.25, jnp.float32))


def fold_params(p):
    """One-time host-side preprocessing: fold affines/gains/phase-shift, split weights, bf16."""
    Din, half = p["N"].shape
    E = 2 * half
    F = p["w2"].shape[0]

    b_rff = p["e"] * p["N"]                                   # (Din, E/2)
    bmat_h = ((2.0 / 1.3) * b_rff).astype(jnp.float32)        # folds x/(1.3*pi) and 2*pi
    xpb_h = ((-2.0 * math.pi) * jnp.sum(b_rff, axis=0, keepdims=True)).astype(jnp.float32)
    # Phase-shift fold: cos(xp) = sin(xp + pi/2) -> tile bmat, shift second half of bias.
    bmat = jnp.concatenate([bmat_h, bmat_h], axis=1)          # (Din, E)
    xp_bias = jnp.concatenate([xpb_h, xpb_h + 0.5 * math.pi], axis=1)  # (1, E)

    g = jnp.tanh(jnp.repeat(p["gain_in"], E))                 # (F,) — apply_gain chunk order
    bf = lambda w: w.astype(jnp.bfloat16)

    w1, wp, bp = p["w1"], p["wp"], p["bp"]
    kp = dict(
        bmat=bmat, xp_bias=xp_bias,
        # layer 1 rows follow cat([sin, cos, feat]); [sin|cos] rows merged, gain folded into feat rows
        w1_sc=bf(w1[:E]), w1_feat=bf(g[:, None] * w1[E:]),
        b1=p["b1"],
        w2=bf(p["w2"]), b2=p["b2"], w3=bf(p["w3"]), b3=p["b3"],
        w4=bf(p["w4"]), b4=p["b4"], w5=bf(p["w5"]), b5=p["b5"],
        # proj rows follow cat([h, sin, cos]); GLU halves kept together in the columns
        wp_h=bf(wp[:F]), wp_sc=bf(wp[F:]), bp=bp.astype(jnp.float32),
        gain_out=p["gain_out"].astype(jnp.float32),
        scalars=p["alphas"].astype(jnp.float32),
    )
    return kp


# ----------------------------------------------------------------------------
# Pure-JAX f32 reference (same math as the PyTorch module)
# ----------------------------------------------------------------------------
def fm_block_ref(p, inp, feature, slider, omega):
    Din, half = p["N"].shape
    E = 2 * half
    b_rff = p["e"] * p["N"]
    _x = inp / (1.3 * math.pi) - 1.0
    xp = 2.0 * math.pi * jnp.einsum("btd,dh->bth", _x, b_rff)
    emb = jnp.concatenate([jnp.sin(xp), jnp.cos(xp)], axis=-1)
    g = jnp.tanh(jnp.repeat(p["gain_in"], E))
    feat = feature * g[None, None, :]
    x = jnp.concatenate([emb, feat], axis=-1)

    def lp(h, w, b, a):
        y = h @ w + b
        return jnp.where(y >= 0.0, y, a * y)

    al = p["alphas"]
    h = lp(x, p["w1"], p["b1"], al[0])
    h = lp(h, p["w2"], p["b2"], al[1])
    h = lp(h, p["w3"], p["b3"], al[2])
    h = lp(h, p["w4"], p["b4"], al[3])
    h = lp(h, p["w5"], p["b5"], al[4])
    x2 = jnp.concatenate([h, emb], axis=-1)
    pr = x2 @ p["wp"] + p["bp"]
    a, b = jnp.split(pr, 2, axis=-1)
    glu = a * jax.nn.sigmoid(b)
    gate = jnp.tanh((slider - 1.0) * p["gain_out"])
    return inp + omega * glu * gate


if __name__ == "__main__":
    B, T = 2, 8
    input_dim, embed_dim, num_features = 4, 32, 4
    feature_dim = embed_dim * num_features  # 128

    key = jax.random.PRNGKey(0)
    k_par, k_in, k_feat, k_sl, k_om = jax.random.split(key, 5)

    raw = init_params(k_par, input_dim, embed_dim, num_features)
    kparams = fold_params(raw)

    inp = jax.random.normal(k_in, (B, T, input_dim), jnp.float32)
    feature = jax.random.normal(k_feat, (B, T, feature_dim), jnp.float32)
    slider = jax.random.uniform(k_sl, (B, T, 1), jnp.float32, 0.0, 2.0)
    omega = jax.random.normal(k_om, (B, T, 1), jnp.float32)

    out = jax.block_until_ready(fm_block(kparams, inp, feature, slider, omega))
    ref = fm_block_ref(raw, inp, feature, slider, omega)

    assert out.shape == (B, T, input_dim)
    # bf16 matmul operands / bf16 feature stream with f32 accumulation -> loose tolerance
    assert jnp.allclose(out, ref, rtol=2e-2, atol=2e-2), "mismatch vs JAX reference"

    print("KERNEL_OK")
</pallas_src>

<mosaic_0001>
module attributes {stable_mosaic.version = 11 : i64} {
  func.func @fm_block_kernel(%arg0: i32, %arg1: memref<16x5xf32, #tpu.memory_space<vmem>>, %arg2: memref<16x128xbf16, #tpu.memory_space<vmem>>, %arg3: memref<4x32xf32, #tpu.memory_space<vmem>>, %arg4: memref<1x32xf32, #tpu.memory_space<vmem>>, %arg5: memref<32x128xbf16, #tpu.memory_space<vmem>>, %arg6: memref<128x128xbf16, #tpu.memory_space<vmem>>, %arg7: memref<1x128xf32, #tpu.memory_space<vmem>>, %arg8: memref<128x128xbf16, #tpu.memory_space<vmem>>, %arg9: memref<1x128xf32, #tpu.memory_space<vmem>>, %arg10: memref<128x128xbf16, #tpu.memory_space<vmem>>, %arg11: memref<1x128xf32, #tpu.memory_space<vmem>>, %arg12: memref<128x128xbf16, #tpu.memory_space<vmem>>, %arg13: memref<1x128xf32, #tpu.memory_space<vmem>>, %arg14: memref<128x128xbf16, #tpu.memory_space<vmem>>, %arg15: memref<1x128xf32, #tpu.memory_space<vmem>>, %arg16: memref<128x8xbf16, #tpu.memory_space<vmem>>, %arg17: memref<32x8xbf16, #tpu.memory_space<vmem>>, %arg18: memref<1x8xf32, #tpu.memory_space<vmem>>, %arg19: memref<5xf32, #tpu.memory_space<smem>>, %arg20: memref<16x4xf32, #tpu.memory_space<vmem>>) attributes {dimension_semantics = [#tpu.dimension_semantics<parallel>], iteration_bounds = array<i64: 1>, scalar_prefetch = 0 : i64, scratch_operands = 0 : i64, tpu.core_type = #tpu.core_type<tc>, window_params = [{transform_indices = @transform_0, window_bounds = array<i64: 16, 5>}, {transform_indices = @transform_1, window_bounds = array<i64: 16, 128>}, {pipeline_mode = #tpu.pipeline_mode<synchronous>, transform_indices = @transform_2, window_bounds = array<i64: 4, 32>}, {pipeline_mode = #tpu.pipeline_mode<synchronous>, transform_indices = @transform_3, window_bounds = array<i64: 1, 32>}, {pipeline_mode = #tpu.pipeline_mode<synchronous>, transform_indices = @transform_4, window_bounds = array<i64: 32, 128>}, {pipeline_mode = #tpu.pipeline_mode<synchronous>, transform_indices = @transform_5, window_bounds = array<i64: 128, 128>}, {pipeline_mode = #tpu.pipeline_mode<synchronous>, transform_indices = @transform_6, window_bounds = array<i64: 1, 128>}, {pipeline_mode = #tpu.pipeline_mode<synchronous>, transform_indices = @transform_7, window_bounds = array<i64: 128, 128>}, {pipeline_mode = #tpu.pipeline_mode<synchronous>, transform_indices = @transform_8, window_bounds = array<i64: 1, 128>}, {pipeline_mode = #tpu.pipeline_mode<synchronous>, transform_indices = @transform_9, window_bounds = array<i64: 128, 128>}, {pipeline_mode = #tpu.pipeline_mode<synchronous>, transform_indices = @transform_10, window_bounds = array<i64: 1, 128>}, {pipeline_mode = #tpu.pipeline_mode<synchronous>, transform_indices = @transform_11, window_bounds = array<i64: 128, 128>}, {pipeline_mode = #tpu.pipeline_mode<synchronous>, transform_indices = @transform_12, window_bounds = array<i64: 1, 128>}, {pipeline_mode = #tpu.pipeline_mode<synchronous>, transform_indices = @transform_13, window_bounds = array<i64: 128, 128>}, {pipeline_mode = #tpu.pipeline_mode<synchronous>, transform_indices = @transform_14, window_bounds = array<i64: 1, 128>}, {pipeline_mode = #tpu.pipeline_mode<synchronous>, transform_indices = @transform_15, window_bounds = array<i64: 128, 8>}, {pipeline_mode = #tpu.pipeline_mode<synchronous>, transform_indices = @transform_16, window_bounds = array<i64: 32, 8>}, {pipeline_mode = #tpu.pipeline_mode<synchronous>, transform_indices = @transform_17, window_bounds = array<i64: 1, 8>}, {transform_indices = @transform_18, window_bounds = array<i64: 5>}, {transform_indices = @transform_19, window_bounds = array<i64: 16, 4>}]} {
    %c0 = arith.constant 0 : index
    %c0_0 = arith.constant 0 : index
    %0 = vector.load %arg1[%c0, %c0_0] : memref<16x5xf32, #tpu.memory_space<vmem>>, vector<16x5xf32>
    %1 = vector.extract_strided_slice %0 {offsets = [0, 0], sizes = [16, 4], strides = [1, 1]} : vector<16x5xf32> to vector<16x4xf32>
    %2 = vector.extract_strided_slice %0 {offsets = [0, 4], sizes = [16, 1], strides = [1, 1]} : vector<16x5xf32> to vector<16x1xf32>
    %c0_1 = arith.constant 0 : index
    %c0_2 = arith.constant 0 : index
    %3 = vector.load %arg3[%c0_1, %c0_2] : memref<4x32xf32, #tpu.memory_space<vmem>>, vector<4x32xf32>
    %cst = arith.constant dense<0.000000e+00> : vector<16x32xf32>
    %4 = tpu.matmul %1, %3, %cst {dimension_numbers = #tpu.dot_dimension_numbers<[1], [0], [0], [1], [0, 0, 1, 1], [], []>} : vector<16x4xf32>, vector<4x32xf32>, vector<16x32xf32> -> vector<16x32xf32>
    %c0_3 = arith.constant 0 : index
    %c0_4 = arith.constant 0 : index
    %5 = vector.load %arg4[%c0_3, %c0_4] : memref<1x32xf32, #tpu.memory_space<vmem>>, vector<1x32xf32>
    %6 = vector.broadcast %5 : vector<1x32xf32> to vector<16x32xf32>
    %7 = arith.addf %4, %6 : vector<16x32xf32>
    %8 = math.sin %7 : vector<16x32xf32>
    %9 = arith.truncf %8 : vector<16x32xf32> to vector<16x32xbf16>
    %c0_5 = arith.constant 0 : index
    %c0_6 = arith.constant 0 : index
    %10 = vector.load %arg2[%c0_5, %c0_6] : memref<16x128xbf16, #tpu.memory_space<vmem>>, vector<16x128xbf16>
    %c0_7 = arith.constant 0 : index
    %c0_8 = arith.constant 0 : index
    %11 = vector.load %arg5[%c0_7, %c0_8] : memref<32x128xbf16, #tpu.memory_space<vmem>>, vector<32x128xbf16>
    %cst_9 = arith.constant dense<0.000000e+00> : vector<16x128xf32>
    %12 = tpu.matmul %9, %11, %cst_9 {dimension_numbers = #tpu.dot_dimension_numbers<[1], [0], [0], [1], [0, 0, 1, 1], [], []>} : vector<16x32xbf16>, vector<32x128xbf16>, vector<16x128xf32> -> vector<16x128xf32>
    %c0_10 = arith.constant 0 : index
    %c0_11 = arith.constant 0 : index
    %13 = vector.load %arg6[%c0_10, %c0_11] : memref<128x128xbf16, #tpu.memory_space<vmem>>, vector<128x128xbf16>
    %cst_12 = arith.constant dense<0.000000e+00> : vector<16x128xf32>
    %14 = tpu.matmul %10, %13, %cst_12 {dimension_numbers = #tpu.dot_dimension_numbers<[1], [0], [0], [1], [0, 0, 1, 1], [], []>} : vector<16x128xbf16>, vector<128x128xbf16>, vector<16x128xf32> -> vector<16x128xf32>
    %15 = arith.addf %12, %14 : vector<16x128xf32>
    %c0_13 = arith.constant 0 : index
    %c0_14 = arith.constant 0 : index
    %16 = vector.load %arg7[%c0_13, %c0_14] : memref<1x128xf32, #tpu.memory_space<vmem>>, vector<1x128xf32>
    %17 = vector.broadcast %16 : vector<1x128xf32> to vector<16x128xf32>
    %18 = arith.addf %15, %17 : vector<16x128xf32>
    %cst_15 = arith.constant 0.000000e+00 : f32
    %19 = vector.broadcast %cst_15 : f32 to vector<16x128xf32>
    %20 = arith.cmpf oge, %18, %19 : vector<16x128xf32>
    %c0_16 = arith.constant 0 : index
    %21 = memref.load %arg19[%c0_16] : memref<5xf32, #tpu.memory_space<smem>>
    %22 = vector.broadcast %21 : f32 to vector<16x128xf32>
    %23 = arith.mulf %22, %18 : vector<16x128xf32>
    %24 = arith.select %20, %18, %23 : vector<16x128xi1>, vector<16x128xf32>
    %25 = arith.truncf %24 : vector<16x128xf32> to vector<16x128xbf16>
    %c1 = arith.constant 1 : index
    %26 = memref.load %arg19[%c1] : memref<5xf32, #tpu.memory_space<smem>>
    %c0_17 = arith.constant 0 : index
    %c0_18 = arith.constant 0 : index
    %27 = vector.load %arg8[%c0_17, %c0_18] : memref<128x128xbf16, #tpu.memory_space<vmem>>, vector<128x128xbf16>
    %cst_19 = arith.constant dense<0.000000e+00> : vector<16x128xf32>
    %28 = tpu.matmul %25, %27, %cst_19 {dimension_numbers = #tpu.dot_dimension_numbers<[1], [0], [0], [1], [0, 0, 1, 1], [], []>} : vector<16x128xbf16>, vector<128x128xbf16>, vector<16x128xf32> -> vector<16x128xf32>
    %c0_20 = arith.constant 0 : index
    %c0_21 = arith.constant 0 : index
    %29 = vector.load %arg9[%c0_20, %c0_21] : memref<1x128xf32, #tpu.memory_space<vmem>>, vector<1x128xf32>
    %30 = vector.broadcast %29 : vector<1x128xf32> to vector<16x128xf32>
    %31 = arith.addf %28, %30 : vector<16x128xf32>
    %cst_22 = arith.constant 0.000000e+00 : f32
    %32 = vector.broadcast %cst_22 : f32 to vector<16x128xf32>
    %33 = arith.cmpf oge, %31, %32 : vector<16x128xf32>
    %34 = vector.broadcast %26 : f32 to vector<16x128xf32>
    %35 = arith.mulf %34, %31 : vector<16x128xf32>
    %36 = arith.select %33, %31, %35 : vector<16x128xi1>, vector<16x128xf32>
    %37 = arith.truncf %36 : vector<16x128xf32> to vector<16x128xbf16>
    %c2 = arith.constant 2 : index
    %38 = memref.load %arg19[%c2] : memref<5xf32, #tpu.memory_space<smem>>
    %c0_23 = arith.constant 0 : index
    %c0_24 = arith.constant 0 : index
    %39 = vector.load %arg10[%c0_23, %c0_24] : memref<128x128xbf16, #tpu.memory_space<vmem>>, vector<128x128xbf16>
    %cst_25 = arith.constant dense<0.000000e+00> : vector<16x128xf32>
    %40 = tpu.matmul %37, %39, %cst_25 {dimension_numbers = #tpu.dot_dimension_numbers<[1], [0], [0], [1], [0, 0, 1, 1], [], []>} : vector<16x128xbf16>, vector<128x128xbf16>, vector<16x128xf32> -> vector<16x128xf32>
    %c0_26 = arith.constant 0 : index
    %c0_27 = arith.constant 0 : index
    %41 = vector.load %arg11[%c0_26, %c0_27] : memref<1x128xf32, #tpu.memory_space<vmem>>, vector<1x128xf32>
    %42 = vector.broadcast %41 : vector<1x128xf32> to vector<16x128xf32>
    %43 = arith.addf %40, %42 : vector<16x128xf32>
    %cst_28 = arith.constant 0.000000e+00 : f32
    %44 = vector.broadcast %cst_28 : f32 to vector<16x128xf32>
    %45 = arith.cmpf oge, %43, %44 : vector<16x128xf32>
    %46 = vector.broadcast %38 : f32 to vector<16x128xf32>
    %47 = arith.mulf %46, %43 : vector<16x128xf32>
    %48 = arith.select %45, %43, %47 : vector<16x128xi1>, vector<16x128xf32>
    %49 = arith.truncf %48 : vector<16x128xf32> to vector<16x128xbf16>
    %c3 = arith.constant 3 : index
    %50 = memref.load %arg19[%c3] : memref<5xf32, #tpu.memory_space<smem>>
    %c0_29 = arith.constant 0 : index
    %c0_30 = arith.constant 0 : index
    %51 = vector.load %arg12[%c0_29, %c0_30] : memref<128x128xbf16, #tpu.memory_space<vmem>>, vector<128x128xbf16>
    %cst_31 = arith.constant dense<0.000000e+00> : vector<16x128xf32>
    %52 = tpu.matmul %49, %51, %cst_31 {dimension_numbers = #tpu.dot_dimension_numbers<[1], [0], [0], [1], [0, 0, 1, 1], [], []>} : vector<16x128xbf16>, vector<128x128xbf16>, vector<16x128xf32> -> vector<16x128xf32>
    %c0_32 = arith.constant 0 : index
    %c0_33 = arith.constant 0 : index
    %53 = vector.load %arg13[%c0_32, %c0_33] : memref<1x128xf32, #tpu.memory_space<vmem>>, vector<1x128xf32>
    %54 = vector.broadcast %53 : vector<1x128xf32> to vector<16x128xf32>
    %55 = arith.addf %52, %54 : vector<16x128xf32>
    %cst_34 = arith.constant 0.000000e+00 : f32
    %56 = vector.broadcast %cst_34 : f32 to vector<16x128xf32>
    %57 = arith.cmpf oge, %55, %56 : vector<16x128xf32>
    %58 = vector.broadcast %50 : f32 to vector<16x128xf32>
    %59 = arith.mulf %58, %55 : vector<16x128xf32>
    %60 = arith.select %57, %55, %59 : vector<16x128xi1>, vector<16x128xf32>
    %61 = arith.truncf %60 : vector<16x128xf32> to vector<16x128xbf16>
    %c4 = arith.constant 4 : index
    %62 = memref.load %arg19[%c4] : memref<5xf32, #tpu.memory_space<smem>>
    %c0_35 = arith.constant 0 : index
    %c0_36 = arith.constant 0 : index
    %63 = vector.load %arg14[%c0_35, %c0_36] : memref<128x128xbf16, #tpu.memory_space<vmem>>, vector<128x128xbf16>
    %cst_37 = arith.constant dense<0.000000e+00> : vector<16x128xf32>
    %64 = tpu.matmul %61, %63, %cst_37 {dimension_numbers = #tpu.dot_dimension_numbers<[1], [0], [0], [1], [0, 0, 1, 1], [], []>} : vector<16x128xbf16>, vector<128x128xbf16>, vector<16x128xf32> -> vector<16x128xf32>
    %c0_38 = arith.constant 0 : index
    %c0_39 = arith.constant 0 : index
    %65 = vector.load %arg15[%c0_38, %c0_39] : memref<1x128xf32, #tpu.memory_space<vmem>>, vector<1x128xf32>
    %66 = vector.broadcast %65 : vector<1x128xf32> to vector<16x128xf32>
    %67 = arith.addf %64, %66 : vector<16x128xf32>
    %cst_40 = arith.constant 0.000000e+00 : f32
    %68 = vector.broadcast %cst_40 : f32 to vector<16x128xf32>
    %69 = arith.cmpf oge, %67, %68 : vector<16x128xf32>
    %70 = vector.broadcast %62 : f32 to vector<16x128xf32>
    %71 = arith.mulf %70, %67 : vector<16x128xf32>
    %72 = arith.select %69, %67, %71 : vector<16x128xi1>, vector<16x128xf32>
    %73 = arith.truncf %72 : vector<16x128xf32> to vector<16x128xbf16>
    %c0_41 = arith.constant 0 : index
    %c0_42 = arith.constant 0 : index
    %74 = vector.load %arg16[%c0_41, %c0_42] : memref<128x8xbf16, #tpu.memory_space<vmem>>, vector<128x8xbf16>
    %cst_43 = arith.constant dense<0.000000e+00> : vector<16x8xf32>
    %75 = tpu.matmul %73, %74, %cst_43 {dimension_numbers = #tpu.dot_dimension_numbers<[1], [0], [0], [1], [0, 0, 1, 1], [], []>} : vector<16x128xbf16>, vector<128x8xbf16>, vector<16x8xf32> -> vector<16x8xf32>
    %c0_44 = arith.constant 0 : index
    %c0_45 = arith.constant 0 : index
    %76 = vector.load %arg17[%c0_44, %c0_45] : memref<32x8xbf16, #tpu.memory_space<vmem>>, vector<32x8xbf16>
    %cst_46 = arith.constant dense<0.000000e+00> : vector<16x8xf32>
    %77 = tpu.matmul %9, %76, %cst_46 {dimension_numbers = #tpu.dot_dimension_numbers<[1], [0], [0], [1], [0, 0, 1, 1], [], []>} : vector<16x32xbf16>, vector<32x8xbf16>, vector<16x8xf32> -> vector<16x8xf32>
    %78 = arith.addf %75, %77 : vector<16x8xf32>
    %c0_47 = arith.constant 0 : index
    %c0_48 = arith.constant 0 : index
    %79 = vector.load %arg18[%c0_47, %c0_48] : memref<1x8xf32, #tpu.memory_space<vmem>>, vector<1x8xf32>
    %80 = vector.broadcast %79 : vector<1x8xf32> to vector<16x8xf32>
    %81 = arith.addf %78, %80 : vector<16x8xf32>
    %82 = vector.extract_strided_slice %81 {offsets = [0, 0], sizes = [16, 4], strides = [1, 1]} : vector<16x8xf32> to vector<16x4xf32>
    %83 = vector.extract_strided_slice %81 {offsets = [0, 4], sizes = [16, 4], strides = [1, 1]} : vector<16x8xf32> to vector<16x4xf32>
    %84 = arith.negf %83 : vector<16x4xf32>
    %85 = math.exp %84 : vector<16x4xf32>
    %cst_49 = arith.constant 1.000000e+00 : f32
    %86 = vector.broadcast %cst_49 : f32 to vector<16x4xf32>
    %87 = arith.addf %86, %85 : vector<16x4xf32>
    %88 = arith.divf %86, %87 : vector<16x4xf32>
    %89 = arith.mulf %82, %88 : vector<16x4xf32>
    %90 = vector.broadcast %2 : vector<16x1xf32> to vector<16x4xf32>
    %91 = arith.mulf %90, %89 : vector<16x4xf32>
    %92 = arith.addf %1, %91 : vector<16x4xf32>
    %c0_50 = arith.constant 0 : index
    %c0_51 = arith.constant 0 : index
    %93 = vector.load %arg20[%c0_50, %c0_51] : memref<16x4xf32, #tpu.memory_space<vmem>>, vector<16x4xf32>
    tpu.vector_store %arg20[%c0_50, %c0_51], %92 {strides = array<i32>} : memref<16x4xf32, #tpu.memory_space<vmem>>, vector<16x4xf32>,
    return
  }
  func.func @transform_0(%arg0: i32) -> (i32, i32) {
    %c0_i32 = arith.constant 0 : i32
    %c0_i32_0 = arith.constant 0 : i32
    return %arg0, %c0_i32 : i32, i32
  }
  func.func @transform_1(%arg0: i32) -> (i32, i32) {
    %c0_i32 = arith.constant 0 : i32
    %c0_i32_0 = arith.constant 0 : i32
    return %arg0, %c0_i32 : i32, i32
  }
  func.func @transform_2(%arg0: i32) -> (i32, i32) {
    %c0_i32 = arith.constant 0 : i32
    %c0_i32_0 = arith.constant 0 : i32
    %c0_i32_1 = arith.constant 0 : i32
    return %c0_i32, %c0_i32_0 : i32, i32
  }
  func.func @transform_3(%arg0: i32) -> (i32, i32) {
    %c0_i32 = arith.constant 0 : i32
    %c0_i32_0 = arith.constant 0 : i32
    %c0_i32_1 = arith.constant 0 : i32
    return %c0_i32, %c0_i32_0 : i32, i32
  }
  func.func @transform_4(%arg0: i32) -> (i32, i32) {
    %c0_i32 = arith.constant 0 : i32
    %c0_i32_0 = arith.constant 0 : i32
    %c0_i32_1 = arith.constant 0 : i32
    return %c0_i32, %c0_i32_0 : i32, i32
  }
  func.func @transform_5(%arg0: i32) -> (i32, i32) {
    %c0_i32 = arith.constant 0 : i32
    %c0_i32_0 = arith.constant 0 : i32
    %c0_i32_1 = arith.constant 0 : i32
    return %c0_i32, %c0_i32_0 : i32, i32
  }
  func.func @transform_6(%arg0: i32) -> (i32, i32) {
    %c0_i32 = arith.constant 0 : i32
    %c0_i32_0 = arith.constant 0 : i32
    %c0_i32_1 = arith.constant 0 : i32
    return %c0_i32, %c0_i32_0 : i32, i32
  }
  func.func @transform_7(%arg0: i32) -> (i32, i32) {
    %c0_i32 = arith.constant 0 : i32
    %c0_i32_0 = arith.constant 0 : i32
    %c0_i32_1 = arith.constant 0 : i32
    return %c0_i32, %c0_i32_0 : i32, i32
  }
  func.func @transform_8(%arg0: i32) -> (i32, i32) {
    %c0_i32 = arith.constant 0 : i32
    %c0_i32_0 = arith.constant 0 : i32
    %c0_i32_1 = arith.constant 0 : i32
    return %c0_i32, %c0_i32_0 : i32, i32
  }
  func.func @transform_9(%arg0: i32) -> (i32, i32) {
    %c0_i32 = arith.constant 0 : i32
    %c0_i32_0 = arith.constant 0 : i32
    %c0_i32_1 = arith.constant 0 : i32
    return %c0_i32, %c0_i32_0 : i32, i32
  }
  func.func @transform_10(%arg0: i32) -> (i32, i32) {
    %c0_i32 = arith.constant 0 : i32
    %c0_i32_0 = arith.constant 0 : i32
    %c0_i32_1 = arith.constant 0 : i32
    return %c0_i32, %c0_i32_0 : i32, i32
  }
  func.func @transform_11(%arg0: i32) -> (i32, i32) {
    %c0_i32 = arith.constant 0 : i32
    %c0_i32_0 = arith.constant 0 : i32
    %c0_i32_1 = arith.constant 0 : i32
    return %c0_i32, %c0_i32_0 : i32, i32
  }
  func.func @transform_12(%arg0: i32) -> (i32, i32) {
    %c0_i32 = arith.constant 0 : i32
    %c0_i32_0 = arith.constant 0 : i32
    %c0_i32_1 = arith.constant 0 : i32
    return %c0_i32, %c0_i32_0 : i32, i32
  }
  func.func @transform_13(%arg0: i32) -> (i32, i32) {
    %c0_i32 = arith.constant 0 : i32
    %c0_i32_0 = arith.constant 0 : i32
    %c0_i32_1 = arith.constant 0 : i32
    return %c0_i32, %c0_i32_0 : i32, i32
  }
  func.func @transform_14(%arg0: i32) -> (i32, i32) {
    %c0_i32 = arith.constant 0 : i32
    %c0_i32_0 = arith.constant 0 : i32
    %c0_i32_1 = arith.constant 0 : i32
    return %c0_i32, %c0_i32_0 : i32, i32
  }
  func.func @transform_15(%arg0: i32) -> (i32, i32) {
    %c0_i32 = arith.constant 0 : i32
    %c0_i32_0 = arith.constant 0 : i32
    %c0_i32_1 = arith.constant 0 : i32
    return %c0_i32, %c0_i32_0 : i32, i32
  }
  func.func @transform_16(%arg0: i32) -> (i32, i32) {
    %c0_i32 = arith.constant 0 : i32
    %c0_i32_0 = arith.constant 0 : i32
    %c0_i32_1 = arith.constant 0 : i32
    return %c0_i32, %c0_i32_0 : i32, i32
  }
  func.func @transform_17(%arg0: i32) -> (i32, i32) {
    %c0_i32 = arith.constant 0 : i32
    %c0_i32_0 = arith.constant 0 : i32
    %c0_i32_1 = arith.constant 0 : i32
    return %c0_i32, %c0_i32_0 : i32, i32
  }
  func.func @transform_18(%arg0: i32) -> i32 {
    %c0_i32 = arith.constant 0 : i32
    %c0_i32_0 = arith.constant 0 : i32
    return %c0_i32 : i32
  }
  func.func @transform_19(%arg0: i32) -> (i32, i32) {
    %c0_i32 = arith.constant 0 : i32
    %c0_i32_0 = arith.constant 0 : i32
    return %arg0, %c0_i32 : i32, i32
  }
}

</mosaic_0001>

<llo_original>
// kernel: tpu_custom_call.1
$region0: #{tpu_custom_call.1}
  #allocation0 [shape = 'u32[]', space=smem, size = 0x4, offset = 0x4, fixed_abs, tag = 'smem constant byte address 0x4 - core index']
  #allocation1 [shape = 'u32[144,128]{1,0:T(1,128)}', space=vmem, size = 0x12000, scoped, tag = 'internal scratch']
  %s0 = inlined_call_operand.vmem [shape: f32[16,5], index: 0, kind: input, shape index: {}]
  %s1 = inlined_call_operand.hbm [shape: bf16[16,128], index: 1, kind: input, shape index: {}]
  %s2 = inlined_call_operand.hbm [shape: f32[4,32], index: 2, kind: input, shape index: {}]
  %s3 = inlined_call_operand.hbm [shape: f32[1,32], index: 3, kind: input, shape index: {}]
  %s4 = inlined_call_operand.hbm [shape: bf16[32,128], index: 4, kind: input, shape index: {}]
  %s5 = inlined_call_operand.vmem [shape: bf16[128,128], index: 5, kind: input, shape index: {}]
  %s6 = inlined_call_operand.hbm [shape: f32[1,128], index: 6, kind: input, shape index: {}]
  %s7 = inlined_call_operand.hbm [shape: bf16[128,128], index: 7, kind: input, shape index: {}]
  %s8 = inlined_call_operand.hbm [shape: f32[1,128], index: 8, kind: input, shape index: {}]
  %s9 = inlined_call_operand.vmem [shape: bf16[128,128], index: 9, kind: input, shape index: {}]
  %s10 = inlined_call_operand.hbm [shape: f32[1,128], index: 10, kind: input, shape index: {}]
  %s11 = inlined_call_operand.hbm [shape: bf16[128,128], index: 11, kind: input, shape index: {}]
  %s12 = inlined_call_operand.vmem [shape: f32[1,128], index: 12, kind: input, shape index: {}]
  %s13 = inlined_call_operand.hbm [shape: bf16[128,128], index: 13, kind: input, shape index: {}]
  %s14 = inlined_call_operand.hbm [shape: f32[1,128], index: 14, kind: input, shape index: {}]
  %s15 = inlined_call_operand.vmem [shape: bf16[128,8], index: 15, kind: input, shape index: {}]
  %s16 = inlined_call_operand.vmem [shape: bf16[32,8], index: 16, kind: input, shape index: {}]
  %s17 = inlined_call_operand.vmem [shape: f32[1,8], index: 17, kind: input, shape index: {}]
  %s18 = inlined_call_operand.vmem [shape: f32[5], index: 18, kind: input, shape index: {}]
  %s19 = inlined_call_operand.vmem [shape: f32[16,4], index: 19, kind: output, shape index: {}]
  %s20 = sld [smem:[#allocation0]]
  $region134: #{tpu_custom_call.1} parent=0
    _
  %s22 = ssub.s32 1, %s20
  %s23 = scalar_select 0, %s22, %s20
  $region1: #{tpu_custom_call.1} parent=0
    #allocation2 [shape = 'u8[4096]{0}', space=vmem, size = 0x1000, scoped, tag = 'input window, operand 1, single buffered']
    #allocation3 [shape = 's32[1]{0}', space=sflag, size = 0x4, scoped, tag = 'scoped memory for tpu_custom_call.1']
    #allocation4 [shape = 's32[1]{0}', space=sflag, size = 0x4, scoped, tag = 'scoped memory for tpu_custom_call.1']
    #allocation5 [shape = 'u8[2048]{0}', space=vmem, size = 0x800, scoped, tag = 'input window, operand 2, single buffered']
    #allocation6 [shape = 's32[1]{0}', space=sflag, size = 0x4, scoped, tag = 'scoped memory for tpu_custom_call.1']
    #allocation7 [shape = 'u8[512]{0}', space=vmem, size = 0x400, scoped, tag = 'input window, operand 3, single buffered']
    #allocation8 [shape = 'u8[8192]{0}', space=vmem, size = 0x2000, scoped, tag = 'input window, operand 4, single buffered']
    #allocation9 [shape = 's32[1]{0}', space=sflag, size = 0x4, scoped, tag = 'scoped memory for tpu_custom_call.1']
    #allocation10 [shape = 'u8[512]{0}', space=vmem, size = 0x400, scoped, tag = 'input window, operand 6, single buffered']
    #allocation11 [shape = 'u8[32768]{0}', space=vmem, size = 0x8000, scoped, tag = 'input window, operand 7, single buffered']
    #allocation12 [shape = 's32[1]{0}', space=sflag, size = 0x4, scoped, tag = 'scoped memory for tpu_custom_call.1']
    #allocation13 [shape = 'u8[512]{0}', space=vmem, size = 0x400, scoped, tag = 'input window, operand 8, single buffered']
    #allocation14 [shape = 'u8[512]{0}', space=vmem, size = 0x400, scoped, tag = 'input window, operand 10, single buffered']
    #allocation15 [shape = 's32[1]{0}', space=sflag, size = 0x4, scoped, tag = 'scoped memory for tpu_custom_call.1']
    #allocation16 [shape = 'u8[32768]{0}', space=vmem, size = 0x8000, scoped, tag = 'input window, operand 11, single buffered']
    #allocation17 [shape = 'u8[32768]{0}', space=vmem, size = 0x8000, scoped, tag = 'input window, operand 13, single buffered']
    #allocation18 [shape = 's32[1]{0}', space=sflag, size = 0x4, scoped, tag = 'scoped memory for tpu_custom_call.1']
    #allocation19 [shape = 'u8[512]{0}', space=vmem, size = 0x400, scoped, tag = 'input window, operand 14, single buffered']
    #allocation20 [shape = 'u8[512]{0}', space=smem, size = 0x200, scoped, tag = 'input window, operand 18, single buffered']
    %24 = vsyncpa [#allocation3], 0
    %25 = vsyncpa [#allocation6], 0
    %26 = vsyncpa [#allocation9], 0
    %27 = vsyncpa [#allocation12], 0
    %28 = vsyncpa [#allocation15], 0
    %29 = vsyncpa [#allocation18], 0
    %30 = vsyncpa [#allocation4], 0
    // Predicated region
    $region2: #{tpu_custom_call.1} parent=1 // pred_check
      _
    $region3: #{tpu_custom_call.1} parent=1 // pred_check_branch
      %32 = sbr.rel (0) target = $region5
    $region4: #{tpu_custom_call.1} parent=1 // pred_region
      _
    $region5: #{tpu_custom_call.1} parent=1 // pred_fallthru
      _
    // Predicated region
    $region6: #{tpu_custom_call.1} parent=1 // pred_check
      _
    $region7: #{tpu_custom_call.1} parent=1 // pred_check_branch
      %34 = sbr.rel (0) target = $region9
    $region8: #{tpu_custom_call.1} parent=1 // pred_region
      %s36 = ssub.s32 128, 128
      %37 = vsyncadd [#allocation3], %s36
      %s38 = sshll.u32 [#allocation2], 4
      %s39 = int_to_ptr.vmem [resolvable:$true] %s38
      %44 = dma.hbm_to_vmem [thread:$0]  %s1, 128, %s39, [#allocation3], 64, 64, 4
    $region9: #{tpu_custom_call.1} parent=1 // pred_fallthru
      _
    // Predicated region
    $region10: #{tpu_custom_call.1} parent=1 // pred_check
      _
    $region11: #{tpu_custom_call.1} parent=1 // pred_check_branch
      %46 = sbr.rel (0) target = $region13
    $region12: #{tpu_custom_call.1} parent=1 // pred_region
      %s48 = ssub.s32 64, 64
      %49 = vsyncadd [#allocation6], %s48
      %s51 = sshll.u32 [#allocation5], 4
      %s52 = int_to_ptr.vmem [resolvable:$true] %s51
      %54 = dma.hbm_to_vmem [thread:$0]  %s2, 64, %s52, [#allocation6]
    $region13: #{tpu_custom_call.1} parent=1 // pred_fallthru
      _
    // Predicated region
    $region14: #{tpu_custom_call.1} parent=1 // pred_check
      _
    $region15: #{tpu_custom_call.1} parent=1 // pred_check_branch
      %56 = sbr.rel (0) target = $region17
    $region16: #{tpu_custom_call.1} parent=1 // pred_region
      %s58 = ssub.s32 16, 16
      %59 = vsyncadd [#allocation6], %s58
      %s61 = sshll.u32 [#allocation7], 4
      %s62 = int_to_ptr.vmem [resolvable:$true] %s61
      %64 = dma.hbm_to_vmem [thread:$0]  %s3, 16, %s62, [#allocation6]
    $region17: #{tpu_custom_call.1} parent=1 // pred_fallthru
      _
    // Predicated region
    $region18: #{tpu_custom_call.1} parent=1 // pred_check
      _
    $region19: #{tpu_custom_call.1} parent=1 // pred_check_branch
      %66 = sbr.rel (0) target = $region21
    $region20: #{tpu_custom_call.1} parent=1 // pred_region
      %s68 = ssub.s32 256, 256
      %69 = vsyncadd [#allocation9], %s68
      %s70 = sshll.u32 [#allocation8], 4
      %s71 = int_to_ptr.vmem [resolvable:$true] %s70
      %76 = dma.hbm_to_vmem [thread:$0]  %s4, 256, %s71, [#allocation9], 64, 64, 4
    $region21: #{tpu_custom_call.1} parent=1 // pred_fallthru
      _
    // Predicated region
    $region22: #{tpu_custom_call.1} parent=1 // pred_check
      _
    $region23: #{tpu_custom_call.1} parent=1 // pred_check_branch
      %78 = sbr.rel (0) target = $region25
    $region24: #{tpu_custom_call.1} parent=1 // pred_region
      _
    $region25: #{tpu_custom_call.1} parent=1 // pred_fallthru
      _
    // Predicated region
    $region26: #{tpu_custom_call.1} parent=1 // pred_check
      _
    $region27: #{tpu_custom_call.1} parent=1 // pred_check_branch
      %80 = sbr.rel (0) target = $region29
    $region28: #{tpu_custom_call.1} parent=1 // pred_region
      %s82 = ssub.s32 16, 16
      %83 = vsyncadd [#allocation9], %s82
      %s85 = sshll.u32 [#allocation10], 4
      %s86 = int_to_ptr.vmem [resolvable:$true] %s85
      %88 = dma.hbm_to_vmem [thread:$0]  %s6, 16, %s86, [#allocation9]
    $region29: #{tpu_custom_call.1} parent=1 // pred_fallthru
      _
    // Predicated region
    $region30: #{tpu_custom_call.1} parent=1 // pred_check
      _
    $region31: #{tpu_custom_call.1} parent=1 // pred_check_branch
      %90 = sbr.rel (0) target = $region33
    $region32: #{tpu_custom_call.1} parent=1 // pred_region
      %s92 = ssub.s32 1024, 1024
      %93 = vsyncadd [#allocation12], %s92
      %s94 = sshll.u32 [#allocation11], 4
      %s95 = int_to_ptr.vmem [resolvable:$true] %s94
      %100 = dma.hbm_to_vmem [thread:$0]  %s7, 1024, %s95, [#allocation12], 64, 64, 4
    $region33: #{tpu_custom_call.1} parent=1 // pred_fallthru
      _
    // Predicated region
    $region34: #{tpu_custom_call.1} parent=1 // pred_check
      _
    $region35: #{tpu_custom_call.1} parent=1 // pred_check_branch
      %102 = sbr.rel (0) target = $region37
    $region36: #{tpu_custom_call.1} parent=1 // pred_region
      %s104 = ssub.s32 16, 16
      %105 = vsyncadd [#allocation12], %s104
      %s107 = sshll.u32 [#allocation13], 4
      %s108 = int_to_ptr.vmem [resolvable:$true] %s107
      %110 = dma.hbm_to_vmem [thread:$0]  %s8, 16, %s108, [#allocation12]
    $region37: #{tpu_custom_call.1} parent=1 // pred_fallthru
      _
    // Predicated region
    $region38: #{tpu_custom_call.1} parent=1 // pred_check
      _
    $region39: #{tpu_custom_call.1} parent=1 // pred_check_branch
      %112 = sbr.rel (0) target = $region41
    $region40: #{tpu_custom_call.1} parent=1 // pred_region
      _
    $region41: #{tpu_custom_call.1} parent=1 // pred_fallthru
      _
    // Predicated region
    $region42: #{tpu_custom_call.1} parent=1 // pred_check
      _
    $region43: #{tpu_custom_call.1} parent=1 // pred_check_branch
      %114 = sbr.rel (0) target = $region45
    $region44: #{tpu_custom_call.1} parent=1 // pred_region
      %s116 = ssub.s32 16, 16
      %117 = vsyncadd [#allocation15], %s116
      %s119 = sshll.u32 [#allocation14], 4
      %s120 = int_to_ptr.vmem [resolvable:$true] %s119
      %122 = dma.hbm_to_vmem [thread:$0]  %s10, 16, %s120, [#allocation15]
    $region45: #{tpu_custom_call.1} parent=1 // pred_fallthru
      _
    // Predicated region
    $region46: #{tpu_custom_call.1} parent=1 // pred_check
      _
    $region47: #{tpu_custom_call.1} parent=1 // pred_check_branch
      %124 = sbr.rel (0) target = $region49
    $region48: #{tpu_custom_call.1} parent=1 // pred_region
      %s126 = ssub.s32 1024, 1024
      %127 = vsyncadd [#allocation15], %s126
      %s128 = sshll.u32 [#allocation16], 4
      %s129 = int_to_ptr.vmem [resolvable:$true] %s128
      %134 = dma.hbm_to_vmem [thread:$0]  %s11, 1024, %s129, [#allocation15], 64, 64, 4
    $region49: #{tpu_custom_call.1} parent=1 // pred_fallthru
      _
    // Predicated region
    $region50: #{tpu_custom_call.1} parent=1 // pred_check
      _
    $region51: #{tpu_custom_call.1} parent=1 // pred_check_branch
      %136 = sbr.rel (0) target = $region53
    $region52: #{tpu_custom_call.1} parent=1 // pred_region
      _
    $region53: #{tpu_custom_call.1} parent=1 // pred_fallthru
      _
    // Predicated region
    $region54: #{tpu_custom_call.1} parent=1 // pred_check
      _
    $region55: #{tpu_custom_call.1} parent=1 // pred_check_branch
      %138 = sbr.rel (0) target = $region57
    $region56: #{tpu_custom_call.1} parent=1 // pred_region
      %s140 = ssub.s32 1024, 1024
      %141 = vsyncadd [#allocation18], %s140
      %s142 = sshll.u32 [#allocation17], 4
      %s143 = int_to_ptr.vmem [resolvable:$true] %s142
      %148 = dma.hbm_to_vmem [thread:$0]  %s13, 1024, %s143, [#allocation18], 64, 64, 4
    $region57: #{tpu_custom_call.1} parent=1 // pred_fallthru
      _
    // Predicated region
    $region58: #{tpu_custom_call.1} parent=1 // pred_check
      _
    $region59: #{tpu_custom_call.1} parent=1 // pred_check_branch
      %150 = sbr.rel (0) target = $region61
    $region60: #{tpu_custom_call.1} parent=1 // pred_region
      %s152 = ssub.s32 16, 16
      %153 = vsyncadd [#allocation18], %s152
      %s155 = sshll.u32 [#allocation19], 4
      %s156 = int_to_ptr.vmem [resolvable:$true] %s155
      %158 = dma.hbm_to_vmem [thread:$0]  %s14, 16, %s156, [#allocation18]
    $region61: #{tpu_custom_call.1} parent=1 // pred_fallthru
      _
    // Predicated region
    $region62: #{tpu_custom_call.1} parent=1 // pred_check
      _
    $region63: #{tpu_custom_call.1} parent=1 // pred_check_branch
      %160 = sbr.rel (0) target = $region65
    $region64: #{tpu_custom_call.1} parent=1 // pred_region
      _
    $region65: #{tpu_custom_call.1} parent=1 // pred_fallthru
      _
    // Predicated region
    $region66: #{tpu_custom_call.1} parent=1 // pred_check
      _
    $region67: #{tpu_custom_call.1} parent=1 // pred_check_branch
      %162 = sbr.rel (0) target = $region69
    $region68: #{tpu_custom_call.1} parent=1 // pred_region
      _
    $region69: #{tpu_custom_call.1} parent=1 // pred_fallthru
      _
    // Predicated region
    $region70: #{tpu_custom_call.1} parent=1 // pred_check
      _
    $region71: #{tpu_custom_call.1} parent=1 // pred_check_branch
      %164 = sbr.rel (0) target = $region73
    $region72: #{tpu_custom_call.1} parent=1 // pred_region
      _
    $region73: #{tpu_custom_call.1} parent=1 // pred_fallthru
      _
    // Predicated region
    $region74: #{tpu_custom_call.1} parent=1 // pred_check
      _
    $region75: #{tpu_custom_call.1} parent=1 // pred_check_branch
      %166 = sbr.rel (0) target = $region77
    $region76: #{tpu_custom_call.1} parent=1 // pred_region
      %s168 = ssub.s32 16, 16
      %169 = vsyncadd [#allocation4], %s168
      %s171 = sshll.u32 %s18, 4
      %s172 = int_to_ptr.vmem [resolvable:$true] %s171
      %174 = dma.vmem_to_smem %s172, 16, [#allocation20], [#allocation4]
    $region77: #{tpu_custom_call.1} parent=1 // pred_fallthru
      _
    // Predicated region
    $region78: #{tpu_custom_call.1} parent=1 // pred_check
      _
    $region79: #{tpu_custom_call.1} parent=1 // pred_check_branch
      %176 = sbr.rel (0) target = $region81
    $region80: #{tpu_custom_call.1} parent=1 // pred_region
      %177 = dma.done [#allocation3], 128
    $region81: #{tpu_custom_call.1} parent=1 // pred_fallthru
      _
    // Predicated region
    $region82: #{tpu_custom_call.1} parent=1 // pred_check
      _
    $region83: #{tpu_custom_call.1} parent=1 // pred_check_branch
      %179 = sbr.rel (0) target = $region85
    $region84: #{tpu_custom_call.1} parent=1 // pred_region
      %180 = dma.done [#allocation6], 64
    $region85: #{tpu_custom_call.1} parent=1 // pred_fallthru
      _
    // Predicated region
    $region86: #{tpu_custom_call.1} parent=1 // pred_check
      _
    $region87: #{tpu_custom_call.1} parent=1 // pred_check_branch
      %182 = sbr.rel (0) target = $region89
    $region88: #{tpu_custom_call.1} parent=1 // pred_region
      %183 = dma.done [#allocation6], 16
    $region89: #{tpu_custom_call.1} parent=1 // pred_fallthru
      _
    // Predicated region
    $region90: #{tpu_custom_call.1} parent=1 // pred_check
      _
    $region91: #{tpu_custom_call.1} parent=1 // pred_check_branch
      %185 = sbr.rel (0) target = $region93
    $region92: #{tpu_custom_call.1} parent=1 // pred_region
      %186 = dma.done [#allocation9], 256
    $region93: #{tpu_custom_call.1} parent=1 // pred_fallthru
      _
    // Predicated region
    $region94: #{tpu_custom_call.1} parent=1 // pred_check
      _
    $region95: #{tpu_custom_call.1} parent=1 // pred_check_branch
      %188 = sbr.rel (0) target = $region97
    $region96: #{tpu_custom_call.1} parent=1 // pred_region
      %189 = dma.done [#allocation9], 16
    $region97: #{tpu_custom_call.1} parent=1 // pred_fallthru
      _
    // Predicated region
    $region98: #{tpu_custom_call.1} parent=1 // pred_check
      _
    $region99: #{tpu_custom_call.1} parent=1 // pred_check_branch
      %191 = sbr.rel (0) target = $region101
    $region100: #{tpu_custom_call.1} parent=1 // pred_region
      %192 = dma.done [#allocation12], 1024
    $region101: #{tpu_custom_call.1} parent=1 // pred_fallthru
      _
    // Predicated region
    $region102: #{tpu_custom_call.1} parent=1 // pred_check
      _
    $region103: #{tpu_custom_call.1} parent=1 // pred_check_branch
      %194 = sbr.rel (0) target = $region105
    $region104: #{tpu_custom_call.1} parent=1 // pred_region
      %195 = dma.done [#allocation12], 16
    $region105: #{tpu_custom_call.1} parent=1 // pred_fallthru
      _
    // Predicated region
    $region106: #{tpu_custom_call.1} parent=1 // pred_check
      _
    $region107: #{tpu_custom_call.1} parent=1 // pred_check_branch
      %197 = sbr.rel (0) target = $region109
    $region108: #{tpu_custom_call.1} parent=1 // pred_region
      %198 = dma.done [#allocation15], 16
    $region109: #{tpu_custom_call.1} parent=1 // pred_fallthru
      _
    // Predicated region
    $region110: #{tpu_custom_call.1} parent=1 // pred_check
      _
    $region111: #{tpu_custom_call.1} parent=1 // pred_check_branch
      %200 = sbr.rel (0) target = $region113
    $region112: #{tpu_custom_call.1} parent=1 // pred_region
      %201 = dma.done [#allocation15], 1024
    $region113: #{tpu_custom_call.1} parent=1 // pred_fallthru
      _
    // Predicated region
    $region114: #{tpu_custom_call.1} parent=1 // pred_check
      _
    $region115: #{tpu_custom_call.1} parent=1 // pred_check_branch
      %203 = sbr.rel (0) target = $region117
    $region116: #{tpu_custom_call.1} parent=1 // pred_region
      %204 = dma.done [#allocation18], 1024
    $region117: #{tpu_custom_call.1} parent=1 // pred_fallthru
      _
    // Predicated region
    $region118: #{tpu_custom_call.1} parent=1 // pred_check
      _
    $region119: #{tpu_custom_call.1} parent=1 // pred_check_branch
      %206 = sbr.rel (0) target = $region121
    $region120: #{tpu_custom_call.1} parent=1 // pred_region
      %207 = dma.done [#allocation18], 16
    $region121: #{tpu_custom_call.1} parent=1 // pred_fallthru
      _
    // Predicated region
    $region122: #{tpu_custom_call.1} parent=1 // pred_check
      _
    $region123: #{tpu_custom_call.1} parent=1 // pred_check_branch
      %209 = sbr.rel (0) target = $region125
    $region124: #{tpu_custom_call.1} parent=1 // pred_region
      %210 = dma.done [#allocation4], 16
    $region125: #{tpu_custom_call.1} parent=1 // pred_fallthru
      _
    %211 = sfence
    %v213 = vld [vmem:[%s0] sm:$0xff]
    %v214 = vld [vmem:[%s0 + $0x8] sm:$0xff]
    %v215 = vld [vmem:[#allocation5] sm:$0xf]
    %v216 = vld [vmem:[#allocation7] sm:$0x1]
    %v218 = vlaneseq
    %v219 = vshrl.u32 %v218, 7
    %v220 = vsub.s32 0, %v219
    %v221 = vrot.slane %v216, %v220
    %vm223 = vcmask 31744
    %v225 = vsel %vm223, %v213, 0
    %v228 = vsel %vm223, %v214, 0
    %vm230 = vcmask 1043456
    %v232 = vsel %vm230, %v215, 0
    %234 = vmatprep.subr.mxu0 0.0
    %235 = vmatpush1.msra.mxu0 0.0
    %236 = vmatprep.subr.mxu0 0.0
    %237 = vmatpush1.msra.mxu0 0.0
    %238 = vmatprep.subr.mxu0 0.0
    %239 = vmatpush1.msra.mxu0 0.0
    %240 = vmatprep.subr.mxu0 0.0
    %241 = vmatpush1.msra.mxu0 0.0
    %242 = vmatprep.subr.mxu0 0.0
    %243 = vmatpush1.msra.mxu0 0.0
    %244 = vmatprep.subr.mxu0 0.0
    %245 = vmatpush1.msra.mxu0 0.0
    %246 = vmatprep.subr.mxu0 0.0
    %247 = vmatpush1.msra.mxu0 0.0
    %248 = vmatprep.subr.mxu0 0.0
    %249 = vmatpush1.msra.mxu0 0.0
    %250 = vmatprep.subr.mxu0 0.0
    %251 = vmatpush1.msra.mxu0 0.0
    %252 = vmatprep.subr.mxu0 0.0
    %253 = vmatpush1.msra.mxu0 0.0
    %254 = vmatprep.subr.mxu0 0.0
    %255 = vmatpush1.msra.mxu0 0.0
    %256 = vmatprep.subr.mxu0 0.0
    %257 = vmatpush1.msra.mxu0 0.0
    %258 = vmatprep.subr.mxu0 0.0
    %259 = vmatpush1.msra.mxu0 0.0
    %260 = vmatprep.subr.mxu0 0.0
    %261 = vmatpush1.msra.mxu0 0.0
    %262 = vmatprep.subr.mxu0 0.0
    %263 = vmatpush1.msra.mxu0 0.0
    %264 = vmatprep.subr.mxu0 0.0
    %265 = vmatpush1.msra.mxu0 %v232
    %266 = vmatprep.subr.mxu0 0.0
    %267 = vmatpush2.msra.mxu0 0.0
    %268 = vmatprep.subr.mxu0 0.0
    %269 = vmatpush2.msra.mxu0 0.0
    %270 = vmatprep.subr.mxu0 0.0
    %271 = vmatpush2.msra.mxu0 0.0
    %272 = vmatprep.subr.mxu0 0.0
    %273 = vmatpush2.msra.mxu0 0.0
    %274 = vmatprep.subr.mxu0 0.0
    %275 = vmatpush2.msra.mxu0 0.0
    %276 = vmatprep.subr.mxu0 0.0
    %277 = vmatpush2.msra.mxu0 0.0
    %278 = vmatprep.subr.mxu0 0.0
    %279 = vmatpush2.msra.mxu0 0.0
    %280 = vmatprep.subr.mxu0 0.0
    %281 = vmatpush2.msra.mxu0 0.0
    %282 = vmatprep.subr.mxu0 0.0
    %283 = vmatpush2.msra.mxu0 0.0
    %284 = vmatprep.subr.mxu0 0.0
    %285 = vmatpush2.msra.mxu0 0.0
    %286 = vmatprep.subr.mxu0 0.0
    %287 = vmatpush2.msra.mxu0 0.0
    %288 = vmatprep.subr.mxu0 0.0
    %289 = vmatpush2.msra.mxu0 0.0
    %290 = vmatprep.subr.mxu0 0.0
    %291 = vmatpush2.msra.mxu0 0.0
    %292 = vmatprep.subr.mxu0 0.0
    %293 = vmatpush2.msra.mxu0 0.0
    %294 = vmatprep.subr.mxu0 0.0
    %295 = vmatpush2.msra.mxu0 0.0
    %296 = vmatprep.subr.mxu0 0.0
    %297 = vmatpush2.msra.mxu0 0.0
    %298 = vmatprep.mubr.f32.mxu0 0.0
    %299 = vmatmul.mubr.f32.gmra.mxu0 %v225
    %v300 = vpop.f32.mrf.mxu0
    %v301 = vadd.f32 %v221, %v300
    %v302 = vpop.f32.mrf.mxu0
    %303 = vmatprep.mubr.f32.mxu0 0.0
    %304 = vmatmul.mubr.f32.gmra.mxu0 %v228
    %v305 = vpop.f32.mrf.mxu0
    %v306 = vadd.f32 %v221, %v305
    %v307 = vpop.f32.mrf.mxu0
    %308 = vdwg.mxu0
    %v309 = vand.u32 2147483647, %v301
    %vm310 = vcmp.le.f32.partialorder %v309, 0.7853982
    %vm311 = vcmp.lt.s32.totalorder %v301, 0
    %v312 = vand.u32 %v301, 2139095040
    %v313 = vshrl.u32 %v312, 23
    %v314 = vsub.s32 %v313, 127
    %v315 = vand.u32 2147483647, %v301
    %v316 = vand.u32 %v315, 8388607
    %v317 = vor.u32 %v316, 8388608
    %v318 = vsub.s32 0, %v317
    %v319 = vadd.s32 %v314, 1
    %vm320 = vcmp.gt.s32.totalorder %v319, 0
    %v321 = vsel %vm320, %v319, 0
    %v322 = vshrl.u32 %v321, 5
    %v323 = vand.u32 %v321, 31
    %v324 = vsub.s32 32, %v323
    %v325 = vshrl.u32 683565275, %v324
    %v326 = vshll.u32 683565275, %v323
    %v327 = vshrl.u32 2475754826, %v324
    %v328 = vor.u32 %v326, %v327
    %v329 = vshll.u32 2475754826, %v323
    %v330 = vshrl.u32 2131351028, %v324
    %v331 = vor.u32 %v329, %v330
    %v332 = vshll.u32 2131351028, %v323
    %v333 = vshrl.u32 2102212464, %v324
    %v334 = vor.u32 %v332, %v333
    %v335 = vshll.u32 2102212464, %v323
    %v336 = vshrl.u32 920167782, %v324
    %v337 = vor.u32 %v335, %v336
    %v338 = vshll.u32 920167782, %v323
    %v339 = vshrl.u32 1326507024, %v324
    %v340 = vor.u32 %v338, %v339
    %vm341 = vcmp.lt.s32.totalorder %v322, 1
    %vm342 = vcmp.lt.s32.totalorder %v322, 2
    %vm343 = vcmp.lt.s32.totalorder %v322, 3
    %vm344 = vcmp.lt.s32.totalorder %v322, 4
    %v345 = vsel %vm341, %v325, %v328
    %v346 = vsel %vm344, %v334, 2102212464
    %v347 = vsel %vm343, %v331, %v346
    %v348 = vsel %vm342, %v345, %v347
    %v349 = vsel %vm341, %v328, %v331
    %v350 = vsel %vm344, %v337, 920167782
    %v351 = vsel %vm343, %v334, %v350
    %v352 = vsel %vm342, %v349, %v351
    %v353 = vsel %vm341, %v331, %v334
    %v354 = vsel %vm344, %v340, 1326507024
    %v355 = vsel %vm343, %v337, %v354
    %v356 = vsel %vm342, %v353, %v355
    %v357 = vshll.u32 %v317, 8
    %v358 = vmul.u32.u64.compose %v357, %v356
    %v359 = vextract.low.u32 %v358
    %v360 = vextract.high.u32 %v358
    %v361 = vmul.u32.u64.compose %v357, %v352
    %v362 = vextract.low.u32 %v361
    %v363 = vextract.high.u32 %v361
    %v364 = vmul.u32 %v357, %v348
    %v365 = vadd.s32 %v360, %v362
    %vm366 = vc.u32 %v360, %v362
    %v367 = vadd.s32 %v363, 1
    %v368 = vsel %vm366, %v367, %v363
    %v369 = vadd.s32 %v364, %v368
    %v370 = vadd.s32 %v369, 536870912
    %v371 = vshrl.u32 %v370, 30
    %v372 = vshll.u32 %v371, 30
    %v373 = vsub.s32 %v369, %v372
    %vm374 = vcmp.lt.s32.totalorder %v373, 0
    %v375 = vsub.s32 0, %v373
    %v376 = vsel %vm374, %v375, %v373
    %v377 = vclz %v376
    %v378 = vsub.s32 %v377, 2
    %vm379 = vcmp.gt.s32.totalorder 0, %v378
    %v380 = vsel %vm379, 0, %v378
    %v381 = vsub.s32 32, %v380
    %v382 = vshll.u32 %v373, %v380
    %v383 = vshrl.u32 %v365, %v381
    %v384 = vor.u32 %v382, %v383
    %v385 = vsub.s32 4294967266, %v380
    %v386 = vadd.s32 %v385, 127
    %v387 = vshll.u32 %v386, 23
    %v388 = vor.u32 4788187, %v387
    %v389 = vand.u32 2147483647, %v388
    %v391 = vcvt.s32.f32 %v384
    %v392 = vmul.f32 %v391, %v389
    %v393 = vxor.u32 %v392, 2147483648
    %v394 = vsel %vm311, %v393, %v392
    %v395 = vsub.s32 4, %v371
    %v396 = vsel %vm311, %v395, %v371
    %v397 = vsel %vm310, %v301, %v394
    %v398 = vsel %vm310, 0, %v396
    %v399 = vcosq.f32.pop %v397
    %v400 = vsinq.f32.pop %v397
    %vm401 = vweird.f32 %v301
    %v402 = vadd.s32 %v398, 3
    %v403 = vand.u32 %v402, 3
    %vm404 = vcmp.lt.s32.totalorder %v403, 2
    %vm405 = vcmp.eq.s32.totalorder %v403, 0
    %v406 = vxor.u32 %v400, 2147483648
    %v407 = vsel %vm405, %v399, %v406
    %vm408 = vcmp.eq.s32.totalorder %v403, 2
    %v409 = vxor.u32 %v399, 2147483648
    %v410 = vsel %vm408, %v409, %v400
    %v411 = vsel %vm404, %v407, %v410
    %v412 = vsel %vm401, nan, %v411
    %v413 = vand.u32 2147483647, %v306
    %vm414 = vcmp.le.f32.partialorder %v413, 0.7853982
    %vm415 = vcmp.lt.s32.totalorder %v306, 0
    %v416 = vand.u32 %v306, 2139095040
    %v417 = vshrl.u32 %v416, 23
    %v418 = vsub.s32 %v417, 127
    %v419 = vand.u32 2147483647, %v306
    %v420 = vand.u32 %v419, 8388607
    %v421 = vor.u32 %v420, 8388608
    %v422 = vsub.s32 0, %v421
    %v423 = vadd.s32 %v418, 1
    %vm424 = vcmp.gt.s32.totalorder %v423, 0
    %v425 = vsel %vm424, %v423, 0
    %v426 = vshrl.u32 %v425, 5
    %v427 = vand.u32 %v425, 31
    %v428 = vsub.s32 32, %v427
    %v429 = vshrl.u32 683565275, %v428
    %v430 = vshll.u32 683565275, %v427
    %v431 = vshrl.u32 2475754826, %v428
    %v432 = vor.u32 %v430, %v431
    %v433 = vshll.u32 2475754826, %v427
    %v434 = vshrl.u32 2131351028, %v428
    %v435 = vor.u32 %v433, %v434
    %v436 = vshll.u32 2131351028, %v427
    %v437 = vshrl.u32 2102212464, %v428
    %v438 = vor.u32 %v436, %v437
    %v439 = vshll.u32 2102212464, %v427
    %v440 = vshrl.u32 920167782, %v428
    %v441 = vor.u32 %v439, %v440
    %v442 = vshll.u32 920167782, %v427
    %v443 = vshrl.u32 1326507024, %v428
    %v444 = vor.u32 %v442, %v443
    %vm445 = vcmp.lt.s32.totalorder %v426, 1
    %vm446 = vcmp.lt.s32.totalorder %v426, 2
    %vm447 = vcmp.lt.s32.totalorder %v426, 3
    %vm448 = vcmp.lt.s32.totalorder %v426, 4
    %v449 = vsel %vm445, %v429, %v432
    %v450 = vsel %vm448, %v438, 2102212464
    %v451 = vsel %vm447, %v435, %v450
    %v452 = vsel %vm446, %v449, %v451
    %v453 = vsel %vm445, %v432, %v435
    %v454 = vsel %vm448, %v441, 920167782
    %v455 = vsel %vm447, %v438, %v454
    %v456 = vsel %vm446, %v453, %v455
    %v457 = vsel %vm445, %v435, %v438
    %v458 = vsel %vm448, %v444, 1326507024
    %v459 = vsel %vm447, %v441, %v458
    %v460 = vsel %vm446, %v457, %v459
    %v461 = vshll.u32 %v421, 8
    %v462 = vmul.u32.u64.compose %v461, %v460
    %v463 = vextract.low.u32 %v462
    %v464 = vextract.high.u32 %v462
    %v465 = vmul.u32.u64.compose %v461, %v456
    %v466 = vextract.low.u32 %v465
    %v467 = vextract.high.u32 %v465
    %v468 = vmul.u32 %v461, %v452
    %v469 = vadd.s32 %v464, %v466
    %vm470 = vc.u32 %v464, %v466
    %v471 = vadd.s32 %v467, 1
    %v472 = vsel %vm470, %v471, %v467
    %v473 = vadd.s32 %v468, %v472
    %v474 = vadd.s32 %v473, 536870912
    %v475 = vshrl.u32 %v474, 30
    %v476 = vshll.u32 %v475, 30
    %v477 = vsub.s32 %v473, %v476
    %vm478 = vcmp.lt.s32.totalorder %v477, 0
    %v479 = vsub.s32 0, %v477
    %v480 = vsel %vm478, %v479, %v477
    %v481 = vclz %v480
    %v482 = vsub.s32 %v481, 2
    %vm483 = vcmp.gt.s32.totalorder 0, %v482
    %v484 = vsel %vm483, 0, %v482
    %v485 = vsub.s32 32, %v484
    %v486 = vshll.u32 %v477, %v484
    %v487 = vshrl.u32 %v469, %v485
    %v488 = vor.u32 %v486, %v487
    %v489 = vsub.s32 4294967266, %v484
    %v490 = vadd.s32 %v489, 127
    %v491 = vshll.u32 %v490, 23
    %v492 = vor.u32 4788187, %v491
    %v493 = vand.u32 2147483647, %v492
    %v495 = vcvt.s32.f32 %v488
    %v496 = vmul.f32 %v495, %v493
    %v497 = vxor.u32 %v496, 2147483648
    %v498 = vsel %vm415, %v497, %v496
    %v499 = vsub.s32 4, %v475
    %v500 = vsel %vm415, %v499, %v475
    %v501 = vsel %vm414, %v306, %v498
    %v502 = vsel %vm414, 0, %v500
    %v503 = vcosq.f32.pop %v501
    %v504 = vsinq.f32.pop %v501
    %vm505 = vweird.f32 %v306
    %v506 = vadd.s32 %v502, 3
    %v507 = vand.u32 %v506, 3
    %vm508 = vcmp.lt.s32.totalorder %v507, 2
    %vm509 = vcmp.eq.s32.totalorder %v507, 0
    %v510 = vxor.u32 %v504, 2147483648
    %v511 = vsel %vm509, %v503, %v510
    %vm512 = vcmp.eq.s32.totalorder %v507, 2
    %v513 = vxor.u32 %v503, 2147483648
    %v514 = vsel %vm512, %v513, %v504
    %v515 = vsel %vm508, %v511, %v514
    %v516 = vsel %vm505, nan, %v515
    %v517 = vpack.c.bf16 %v516, %v412
    %v518 = vld [vmem:[#allocation2] sm:$0xf]
    %v519 = vld [vmem:[#allocation2 + $0x4] sm:$0xf]
    %v520 = vld [vmem:[#allocation8] sm:$0xf]
    %v521 = vld [vmem:[#allocation8 + $0x4] sm:$0xf]
    %v522 = vld [vmem:[#allocation8 + $0x8] sm:$0xf]
    %v523 = vld [vmem:[#allocation8 + $0xc] sm:$0xf]
    %v524 = vld [vmem:[%s5] sm:$0xf]
    %v525 = vld [vmem:[%s5 + $0x4] sm:$0xf]
    %v526 = vld [vmem:[%s5 + $0x8] sm:$0xf]
    %v527 = vld [vmem:[%s5 + $0xc] sm:$0xf]
    %v528 = vld [vmem:[%s5 + $0x10] sm:$0xf]
    %v529 = vld [vmem:[%s5 + $0x14] sm:$0xf]
    %v530 = vld [vmem:[%s5 + $0x18] sm:$0xf]
    %v531 = vld [vmem:[%s5 + $0x1c] sm:$0xf]
    %v532 = vld [vmem:[%s5 + $0x20] sm:$0xf]
    %v533 = vld [vmem:[%s5 + $0x24] sm:$0xf]
    %v534 = vld [vmem:[%s5 + $0x28] sm:$0xf]
    %v535 = vld [vmem:[%s5 + $0x2c] sm:$0xf]
    %v536 = vld [vmem:[%s5 + $0x30] sm:$0xf]
    %v537 = vld [vmem:[%s5 + $0x34] sm:$0xf]
    %v538 = vld [vmem:[%s5 + $0x38] sm:$0xf]
    %v539 = vld [vmem:[%s5 + $0x3c] sm:$0xf]
    %v542 = vunpack.c.l.b16 %v518
    %v543 = vunpack.c.l.b16 %v519
    %v544 = vpack.c.b16 %v543, %v542
    %v562 = vunpack.c.l.b16 %v524
    %v563 = vunpack.c.l.b16 %v525
    %v564 = vunpack.c.l.b16 %v526
    %v565 = vunpack.c.l.b16 %v527
    %v566 = vunpack.c.l.b16 %v528
    %v567 = vunpack.c.l.b16 %v529
    %v568 = vunpack.c.l.b16 %v530
    %v569 = vunpack.c.l.b16 %v531
    %v570 = vunpack.c.l.b16 %v532
    %v571 = vunpack.c.l.b16 %v533
    %v572 = vunpack.c.l.b16 %v534
    %v573 = vunpack.c.l.b16 %v535
    %v574 = vunpack.c.l.b16 %v536
    %v575 = vunpack.c.l.b16 %v537
    %v576 = vunpack.c.l.b16 %v538
    %v577 = vunpack.c.l.b16 %v539
    %v578 = vpack.c.b16 %v563, %v562
    %v579 = vpack.c.b16 %v565, %v564
    %v580 = vpack.c.b16 %v567, %v566
    %v581 = vpack.c.b16 %v569, %v568
    %v582 = vpack.c.b16 %v571, %v570
    %v583 = vpack.c.b16 %v573, %v572
    %v584 = vpack.c.b16 %v575, %v574
    %v585 = vpack.c.b16 %v577, %v576
    %594 = vmatprep.subr.bf16.mxu0 0
    %595 = vmatpush1.bf16.msra.mxu0 %v585
    %596 = vmatprep.subr.bf16.mxu0 0
    %597 = vmatpush1.bf16.msra.mxu0 %v584
    %598 = vmatprep.subr.bf16.mxu0 0
    %599 = vmatpush1.bf16.msra.mxu0 %v583
    %600 = vmatprep.subr.bf16.mxu0 0
    %601 = vmatpush1.bf16.msra.mxu0 %v582
    %602 = vmatprep.subr.bf16.mxu0 0
    %603 = vmatpush1.bf16.msra.mxu0 %v581
    %604 = vmatprep.subr.bf16.mxu0 0
    %605 = vmatpush1.bf16.msra.mxu0 %v580
    %606 = vmatprep.subr.bf16.mxu0 0
    %607 = vmatpush1.bf16.msra.mxu0 %v579
    %608 = vmatprep.subr.bf16.mxu0 0
    %609 = vmatpush1.bf16.msra.mxu0 %v578
    %610 = vmatprep.subr.bf16.mxu0 0
    %611 = vmatpush2.bf16.msra.mxu0 0
    %612 = vmatprep.subr.bf16.mxu0 0
    %613 = vmatpush2.bf16.msra.mxu0 0
    %614 = vmatprep.subr.bf16.mxu0 0
    %615 = vmatpush2.bf16.msra.mxu0 0
    %616 = vmatprep.subr.bf16.mxu0 0
    %617 = vmatpush2.bf16.msra.mxu0 0
    %618 = vmatprep.subr.bf16.mxu0 0
    %619 = vmatpush2.bf16.msra.mxu0 0
    %620 = vmatprep.subr.bf16.mxu0 0
    %621 = vmatpush2.bf16.msra.mxu0 0
    %622 = vmatprep.subr.bf16.mxu0 0
    %623 = vmatpush2.bf16.msra.mxu0 0
    %624 = vmatprep.subr.bf16.mxu0 0
    %625 = vmatpush2.bf16.msra.mxu0 0
    %626 = vmatprep.mubr.bf16.mxu0 0
    %627 = vmatmul.mubr.bf16.gmra.mxu0 %v544
    %v628 = vpop.f32.mrf.mxu0
    %v629 = vadd.f32 0.0, %v628
    %v630 = vpop.f32.mrf.mxu0
    %v631 = vpop.f32.mrf.mxu0
    %v632 = vadd.f32 0.0, %v631
    %v633 = vpop.f32.mrf.mxu0
    %634 = vdwg.mxu0
    %v639 = vunpack.c.l.b16 %v520
    %v640 = vunpack.c.l.b16 %v521
    %v641 = vunpack.c.l.b16 %v522
    %v642 = vunpack.c.l.b16 %v523
    %v643 = vpack.c.b16 %v640, %v639
    %v644 = vpack.c.b16 %v642, %v641
    %vm647 = vcmask 261120
    %v649 = vsel %vm647, %v517, 0
    %651 = vmatprep.subr.bf16.mxu0 0
    %652 = vmatpush1.bf16.msra.mxu0 0
    %653 = vmatprep.subr.bf16.mxu0 0
    %654 = vmatpush1.bf16.msra.mxu0 0
    %655 = vmatprep.subr.bf16.mxu0 0
    %656 = vmatpush1.bf16.msra.mxu0 0
    %657 = vmatprep.subr.bf16.mxu0 0
    %658 = vmatpush1.bf16.msra.mxu0 0
    %659 = vmatprep.subr.bf16.mxu0 0
    %660 = vmatpush1.bf16.msra.mxu0 0
    %661 = vmatprep.subr.bf16.mxu0 0
    %662 = vmatpush1.bf16.msra.mxu0 0
    %663 = vmatprep.subr.bf16.mxu0 0
    %664 = vmatpush1.bf16.msra.mxu0 %v644
    %665 = vmatprep.subr.bf16.mxu0 0
    %666 = vmatpush1.bf16.msra.mxu0 %v643
    %667 = vmatprep.subr.bf16.mxu0 0
    %668 = vmatpush2.bf16.msra.mxu0 0
    %669 = vmatprep.subr.bf16.mxu0 0
    %670 = vmatpush2.bf16.msra.mxu0 0
    %671 = vmatprep.subr.bf16.mxu0 0
    %672 = vmatpush2.bf16.msra.mxu0 0
    %673 = vmatprep.subr.bf16.mxu0 0
    %674 = vmatpush2.bf16.msra.mxu0 0
    %675 = vmatprep.subr.bf16.mxu0 0
    %676 = vmatpush2.bf16.msra.mxu0 0
    %677 = vmatprep.subr.bf16.mxu0 0
    %678 = vmatpush2.bf16.msra.mxu0 0
    %679 = vmatprep.subr.bf16.mxu0 0
    %680 = vmatpush2.bf16.msra.mxu0 0
    %681 = vmatprep.subr.bf16.mxu0 0
    %682 = vmatpush2.bf16.msra.mxu0 0
    %683 = vmatprep.mubr.bf16.mxu0 0
    %684 = vmatmul.mubr.bf16.gmra.mxu0 %v649
    %v685 = vpop.f32.mrf.mxu0
    %v686 = vadd.f32 %v629, %v685
    %v687 = vpop.f32.mrf.mxu0
    %v688 = vpop.f32.mrf.mxu0
    %v689 = vadd.f32 %v632, %v688
    %v690 = vpop.f32.mrf.mxu0
    %691 = vdwg.mxu0
    %v692 = vld [vmem:[#allocation10] sm:$0x1]
    %v694 = vlaneseq
    %v695 = vshrl.u32 %v694, 7
    %v696 = vsub.s32 0, %v695
    %v697 = vrot.slane %v692, %v696
    %v699 = vadd.f32 %v686, %v697
    %v700 = vadd.f32 %v689, %v697
    %vm701 = vcmp.ge.f32.partialorder %v699, 0.0
    %vm702 = vcmp.ge.f32.partialorder %v700, 0.0
    %s703 = sld [smem:[#allocation20]]
    %v704 = vstv %s703
    %v705 = vmul.f32 %v704, %v699
    %v706 = vmul.f32 %v704, %v700
    %v707 = vsel %vm701, %v699, %v705
    %v708 = vsel %vm702, %v700, %v706
    %v709 = vpack.c.bf16 %v708, %v707
    %s710 = sld [smem:[#allocation20 + $0x1]]
    %v711 = vld [vmem:[#allocation11] sm:$0xf]
    %v712 = vld [vmem:[#allocation11 + $0x4] sm:$0xf]
    %v713 = vld [vmem:[#allocation11 + $0x8] sm:$0xf]
    %v714 = vld [vmem:[#allocation11 + $0xc] sm:$0xf]
    %v715 = vld [vmem:[#allocation11 + $0x10] sm:$0xf]
    %v716 = vld [vmem:[#allocation11 + $0x14] sm:$0xf]
    %v717 = vld [vmem:[#allocation11 + $0x18] sm:$0xf]
    %v718 = vld [vmem:[#allocation11 + $0x1c] sm:$0xf]
    %v719 = vld [vmem:[#allocation11 + $0x20] sm:$0xf]
    %v720 = vld [vmem:[#allocation11 + $0x24] sm:$0xf]
    %v721 = vld [vmem:[#allocation11 + $0x28] sm:$0xf]
    %v722 = vld [vmem:[#allocation11 + $0x2c] sm:$0xf]
    %v723 = vld [vmem:[#allocation11 + $0x30] sm:$0xf]
    %v724 = vld [vmem:[#allocation11 + $0x34] sm:$0xf]
    %v725 = vld [vmem:[#allocation11 + $0x38] sm:$0xf]
    %v726 = vld [vmem:[#allocation11 + $0x3c] sm:$0xf]
    %v727 = vld [vmem:[#allocation13] sm:$0x1]
    %v729 = vlaneseq
    %v730 = vshrl.u32 %v729, 7
    %v731 = vsub.s32 0, %v730
    %v732 = vrot.slane %v727, %v731
    %v750 = vunpack.c.l.b16 %v711
    %v751 = vunpack.c.l.b16 %v712
    %v752 = vunpack.c.l.b16 %v713
    %v753 = vunpack.c.l.b16 %v714
    %v754 = vunpack.c.l.b16 %v715
    %v755 = vunpack.c.l.b16 %v716
    %v756 = vunpack.c.l.b16 %v717
    %v757 = vunpack.c.l.b16 %v718
    %v758 = vunpack.c.l.b16 %v719
    %v759 = vunpack.c.l.b16 %v720
    %v760 = vunpack.c.l.b16 %v721
    %v761 = vunpack.c.l.b16 %v722
    %v762 = vunpack.c.l.b16 %v723
    %v763 = vunpack.c.l.b16 %v724
    %v764 = vunpack.c.l.b16 %v725
    %v765 = vunpack.c.l.b16 %v726
    %v766 = vpack.c.b16 %v751, %v750
    %v767 = vpack.c.b16 %v753, %v752
    %v768 = vpack.c.b16 %v755, %v754
    %v769 = vpack.c.b16 %v757, %v756
    %v770 = vpack.c.b16 %v759, %v758
    %v771 = vpack.c.b16 %v761, %v760
    %v772 = vpack.c.b16 %v763, %v762
    %v773 = vpack.c.b16 %v765, %v764
    %782 = vmatprep.subr.bf16.mxu0 0
    %783 = vmatpush1.bf16.msra.mxu0 %v773
    %784 = vmatprep.subr.bf16.mxu0 0
    %785 = vmatpush1.bf16.msra.mxu0 %v772
    %786 = vmatprep.subr.bf16.mxu0 0
    %787 = vmatpush1.bf16.msra.mxu0 %v771
    %788 = vmatprep.subr.bf16.mxu0 0
    %789 = vmatpush1.bf16.msra.mxu0 %v770
    %790 = vmatprep.subr.bf16.mxu0 0
    %791 = vmatpush1.bf16.msra.mxu0 %v769
    %792 = vmatprep.subr.bf16.mxu0 0
    %793 = vmatpush1.bf16.msra.mxu0 %v768
    %794 = vmatprep.subr.bf16.mxu0 0
    %795 = vmatpush1.bf16.msra.mxu0 %v767
    %796 = vmatprep.subr.bf16.mxu0 0
    %797 = vmatpush1.bf16.msra.mxu0 %v766
    %798 = vmatprep.subr.bf16.mxu0 0
    %799 = vmatpush2.bf16.msra.mxu0 0
    %800 = vmatprep.subr.bf16.mxu0 0
    %801 = vmatpush2.bf16.msra.mxu0 0
    %802 = vmatprep.subr.bf16.mxu0 0
    %803 = vmatpush2.bf16.msra.mxu0 0
    %804 = vmatprep.subr.bf16.mxu0 0
    %805 = vmatpush2.bf16.msra.mxu0 0
    %806 = vmatprep.subr.bf16.mxu0 0
    %807 = vmatpush2.bf16.msra.mxu0 0
    %808 = vmatprep.subr.bf16.mxu0 0
    %809 = vmatpush2.bf16.msra.mxu0 0
    %810 = vmatprep.subr.bf16.mxu0 0
    %811 = vmatpush2.bf16.msra.mxu0 0
    %812 = vmatprep.subr.bf16.mxu0 0
    %813 = vmatpush2.bf16.msra.mxu0 0
    %814 = vmatprep.mubr.bf16.mxu0 0
    %815 = vmatmul.mubr.bf16.gmra.mxu0 %v709
    %v816 = vpop.f32.mrf.mxu0
    %v817 = vadd.f32 %v732, %v816
    %v818 = vpop.f32.mrf.mxu0
    %v819 = vpop.f32.mrf.mxu0
    %v820 = vadd.f32 %v732, %v819
    %v821 = vpop.f32.mrf.mxu0
    %822 = vdwg.mxu0
    %vm823 = vcmp.ge.f32.partialorder %v817, 0.0
    %vm824 = vcmp.ge.f32.partialorder %v820, 0.0
    %v825 = vstv %s710
    %v826 = vmul.f32 %v825, %v817
    %v827 = vmul.f32 %v825, %v820
    %v828 = vsel %vm823, %v817, %v826
    %v829 = vsel %vm824, %v820, %v827
    %v830 = vpack.c.bf16 %v829, %v828
    %s831 = sld [smem:[#allocation20 + $0x2]]
    %v832 = vld [vmem:[%s9] sm:$0xf]
    %v833 = vld [vmem:[%s9 + $0x4] sm:$0xf]
    %v834 = vld [vmem:[%s9 + $0x8] sm:$0xf]
    %v835 = vld [vmem:[%s9 + $0xc] sm:$0xf]
    %v836 = vld [vmem:[%s9 + $0x10] sm:$0xf]
    %v837 = vld [vmem:[%s9 + $0x14] sm:$0xf]
    %v838 = vld [vmem:[%s9 + $0x18] sm:$0xf]
    %v839 = vld [vmem:[%s9 + $0x1c] sm:$0xf]
    %v840 = vld [vmem:[%s9 + $0x20] sm:$0xf]
    %v841 = vld [vmem:[%s9 + $0x24] sm:$0xf]
    %v842 = vld [vmem:[%s9 + $0x28] sm:$0xf]
    %v843 = vld [vmem:[%s9 + $0x2c] sm:$0xf]
    %v844 = vld [vmem:[%s9 + $0x30] sm:$0xf]
    %v845 = vld [vmem:[%s9 + $0x34] sm:$0xf]
    %v846 = vld [vmem:[%s9 + $0x38] sm:$0xf]
    %v847 = vld [vmem:[%s9 + $0x3c] sm:$0xf]
    %v848 = vld [vmem:[#allocation14] sm:$0x1]
    %v850 = vlaneseq
    %v851 = vshrl.u32 %v850, 7
    %v852 = vsub.s32 0, %v851
    %v853 = vrot.slane %v848, %v852
    %v871 = vunpack.c.l.b16 %v832
    %v872 = vunpack.c.l.b16 %v833
    %v873 = vunpack.c.l.b16 %v834
    %v874 = vunpack.c.l.b16 %v835
    %v875 = vunpack.c.l.b16 %v836
    %v876 = vunpack.c.l.b16 %v837
    %v877 = vunpack.c.l.b16 %v838
    %v878 = vunpack.c.l.b16 %v839
    %v879 = vunpack.c.l.b16 %v840
    %v880 = vunpack.c.l.b16 %v841
    %v881 = vunpack.c.l.b16 %v842
    %v882 = vunpack.c.l.b16 %v843
    %v883 = vunpack.c.l.b16 %v844
    %v884 = vunpack.c.l.b16 %v845
    %v885 = vunpack.c.l.b16 %v846
    %v886 = vunpack.c.l.b16 %v847
    %v887 = vpack.c.b16 %v872, %v871
    %v888 = vpack.c.b16 %v874, %v873
    %v889 = vpack.c.b16 %v876, %v875
    %v890 = vpack.c.b16 %v878, %v877
    %v891 = vpack.c.b16 %v880, %v879
    %v892 = vpack.c.b16 %v882, %v881
    %v893 = vpack.c.b16 %v884, %v883
    %v894 = vpack.c.b16 %v886, %v885
    %903 = vmatprep.subr.bf16.mxu0 0
    %904 = vmatpush1.bf16.msra.mxu0 %v894
    %905 = vmatprep.subr.bf16.mxu0 0
    %906 = vmatpush1.bf16.msra.mxu0 %v893
    %907 = vmatprep.subr.bf16.mxu0 0
    %908 = vmatpush1.bf16.msra.mxu0 %v892
    %909 = vmatprep.subr.bf16.mxu0 0
    %910 = vmatpush1.bf16.msra.mxu0 %v891
    %911 = vmatprep.subr.bf16.mxu0 0
    %912 = vmatpush1.bf16.msra.mxu0 %v890
    %913 = vmatprep.subr.bf16.mxu0 0
    %914 = vmatpush1.bf16.msra.mxu0 %v889
    %915 = vmatprep.subr.bf16.mxu0 0
    %916 = vmatpush1.bf16.msra.mxu0 %v888
    %917 = vmatprep.subr.bf16.mxu0 0
    %918 = vmatpush1.bf16.msra.mxu0 %v887
    %919 = vmatprep.subr.bf16.mxu0 0
    %920 = vmatpush2.bf16.msra.mxu0 0
    %921 = vmatprep.subr.bf16.mxu0 0
    %922 = vmatpush2.bf16.msra.mxu0 0
    %923 = vmatprep.subr.bf16.mxu0 0
    %924 = vmatpush2.bf16.msra.mxu0 0
    %925 = vmatprep.subr.bf16.mxu0 0
    %926 = vmatpush2.bf16.msra.mxu0 0
    %927 = vmatprep.subr.bf16.mxu0 0
    %928 = vmatpush2.bf16.msra.mxu0 0
    %929 = vmatprep.subr.bf16.mxu0 0
    %930 = vmatpush2.bf16.msra.mxu0 0
    %931 = vmatprep.subr.bf16.mxu0 0
    %932 = vmatpush2.bf16.msra.mxu0 0
    %933 = vmatprep.subr.bf16.mxu0 0
    %934 = vmatpush2.bf16.msra.mxu0 0
    %935 = vmatprep.mubr.bf16.mxu0 0
    %936 = vmatmul.mubr.bf16.gmra.mxu0 %v830
    %v937 = vpop.f32.mrf.mxu0
    %v938 = vadd.f32 %v853, %v937
    %v939 = vpop.f32.mrf.mxu0
    %v940 = vpop.f32.mrf.mxu0
    %v941 = vadd.f32 %v853, %v940
    %v942 = vpop.f32.mrf.mxu0
    %943 = vdwg.mxu0
    %vm944 = vcmp.ge.f32.partialorder %v938, 0.0
    %vm945 = vcmp.ge.f32.partialorder %v941, 0.0
    %v946 = vstv %s831
    %v947 = vmul.f32 %v946, %v938
    %v948 = vmul.f32 %v946, %v941
    %v949 = vsel %vm944, %v938, %v947
    %v950 = vsel %vm945, %v941, %v948
    %v951 = vpack.c.bf16 %v950, %v949
    %s952 = sld [smem:[#allocation20 + $0x3]]
    %v953 = vld [vmem:[#allocation16] sm:$0xf]
    %v954 = vld [vmem:[#allocation16 + $0x4] sm:$0xf]
    %v955 = vld [vmem:[#allocation16 + $0x8] sm:$0xf]
    %v956 = vld [vmem:[#allocation16 + $0xc] sm:$0xf]
    %v957 = vld [vmem:[#allocation16 + $0x10] sm:$0xf]
    %v958 = vld [vmem:[#allocation16 + $0x14] sm:$0xf]
    %v959 = vld [vmem:[#allocation16 + $0x18] sm:$0xf]
    %v960 = vld [vmem:[#allocation16 + $0x1c] sm:$0xf]
    %v961 = vld [vmem:[#allocation16 + $0x20] sm:$0xf]
    %v962 = vld [vmem:[#allocation16 + $0x24] sm:$0xf]
    %v963 = vld [vmem:[#allocation16 + $0x28] sm:$0xf]
    %v964 = vld [vmem:[#allocation16 + $0x2c] sm:$0xf]
    %v965 = vld [vmem:[#allocation16 + $0x30] sm:$0xf]
    %v966 = vld [vmem:[#allocation16 + $0x34] sm:$0xf]
    %v967 = vld [vmem:[#allocation16 + $0x38] sm:$0xf]
    %v968 = vld [vmem:[#allocation16 + $0x3c] sm:$0xf]
    %v969 = vld [vmem:[%s12] sm:$0x1]
    %v971 = vlaneseq
    %v972 = vshrl.u32 %v971, 7
    %v973 = vsub.s32 0, %v972
    %v974 = vrot.slane %v969, %v973
    %v992 = vunpack.c.l.b16 %v953
    %v993 = vunpack.c.l.b16 %v954
    %v994 = vunpack.c.l.b16 %v955
    %v995 = vunpack.c.l.b16 %v956
    %v996 = vunpack.c.l.b16 %v957
    %v997 = vunpack.c.l.b16 %v958
    %v998 = vunpack.c.l.b16 %v959
    %v999 = vunpack.c.l.b16 %v960
    %v1000 = vunpack.c.l.b16 %v961
    %v1001 = vunpack.c.l.b16 %v962
    %v1002 = vunpack.c.l.b16 %v963
    %v1003 = vunpack.c.l.b16 %v964
    %v1004 = vunpack.c.l.b16 %v965
    %v1005 = vunpack.c.l.b16 %v966
    %v1006 = vunpack.c.l.b16 %v967
    %v1007 = vunpack.c.l.b16 %v968
    %v1008 = vpack.c.b16 %v993, %v992
    %v1009 = vpack.c.b16 %v995, %v994
    %v1010 = vpack.c.b16 %v997, %v996
    %v1011 = vpack.c.b16 %v999, %v998
    %v1012 = vpack.c.b16 %v1001, %v1000
    %v1013 = vpack.c.b16 %v1003, %v1002
    %v1014 = vpack.c.b16 %v1005, %v1004
    %v1015 = vpack.c.b16 %v1007, %v1006
    %1024 = vmatprep.subr.bf16.mxu0 0
    %1025 = vmatpush1.bf16.msra.mxu0 %v1015
    %1026 = vmatprep.subr.bf16.mxu0 0
    %1027 = vmatpush1.bf16.msra.mxu0 %v1014
    %1028 = vmatprep.subr.bf16.mxu0 0
    %1029 = vmatpush1.bf16.msra.mxu0 %v1013
    %1030 = vmatprep.subr.bf16.mxu0 0
    %1031 = vmatpush1.bf16.msra.mxu0 %v1012
    %1032 = vmatprep.subr.bf16.mxu0 0
    %1033 = vmatpush1.bf16.msra.mxu0 %v1011
    %1034 = vmatprep.subr.bf16.mxu0 0
    %1035 = vmatpush1.bf16.msra.mxu0 %v1010
    %1036 = vmatprep.subr.bf16.mxu0 0
    %1037 = vmatpush1.bf16.msra.mxu0 %v1009
    %1038 = vmatprep.subr.bf16.mxu0 0
    %1039 = vmatpush1.bf16.msra.mxu0 %v1008
    %1040 = vmatprep.subr.bf16.mxu0 0
    %1041 = vmatpush2.bf16.msra.mxu0 0
    %1042 = vmatprep.subr.bf16.mxu0 0
    %1043 = vmatpush2.bf16.msra.mxu0 0
    %1044 = vmatprep.subr.bf16.mxu0 0
    %1045 = vmatpush2.bf16.msra.mxu0 0
    %1046 = vmatprep.subr.bf16.mxu0 0
    %1047 = vmatpush2.bf16.msra.mxu0 0
    %1048 = vmatprep.subr.bf16.mxu0 0
    %1049 = vmatpush2.bf16.msra.mxu0 0
    %1050 = vmatprep.subr.bf16.mxu0 0
    %1051 = vmatpush2.bf16.msra.mxu0 0
    %1052 = vmatprep.subr.bf16.mxu0 0
    %1053 = vmatpush2.bf16.msra.mxu0 0
    %1054 = vmatprep.subr.bf16.mxu0 0
    %1055 = vmatpush2.bf16.msra.mxu0 0
    %1056 = vmatprep.mubr.bf16.mxu0 0
    %1057 = vmatmul.mubr.bf16.gmra.mxu0 %v951
    %v1058 = vpop.f32.mrf.mxu0
    %v1059 = vadd.f32 %v974, %v1058
    %v1060 = vpop.f32.mrf.mxu0
    %v1061 = vpop.f32.mrf.mxu0
    %v1062 = vadd.f32 %v974, %v1061
    %v1063 = vpop.f32.mrf.mxu0
    %1064 = vdwg.mxu0
    %vm1065 = vcmp.ge.f32.partialorder %v1059, 0.0
    %vm1066 = vcmp.ge.f32.partialorder %v1062, 0.0
    %v1067 = vstv %s952
    %v1068 = vmul.f32 %v1067, %v1059
    %v1069 = vmul.f32 %v1067, %v1062
    %v1070 = vsel %vm1065, %v1059, %v1068
    %v1071 = vsel %vm1066, %v1062, %v1069
    %v1072 = vpack.c.bf16 %v1071, %v1070
    %s1073 = sld [smem:[#allocation20 + $0x4]]
    %v1074 = vld [vmem:[#allocation17] sm:$0xf]
    %v1075 = vld [vmem:[#allocation17 + $0x4] sm:$0xf]
    %v1076 = vld [vmem:[#allocation17 + $0x8] sm:$0xf]
    %v1077 = vld [vmem:[#allocation17 + $0xc] sm:$0xf]
    %v1078 = vld [vmem:[#allocation17 + $0x10] sm:$0xf]
    %v1079 = vld [vmem:[#allocation17 + $0x14] sm:$0xf]
    %v1080 = vld [vmem:[#allocation17 + $0x18] sm:$0xf]
    %v1081 = vld [vmem:[#allocation17 + $0x1c] sm:$0xf]
    %v1082 = vld [vmem:[#allocation17 + $0x20] sm:$0xf]
    %v1083 = vld [vmem:[#allocation17 + $0x24] sm:$0xf]
    %v1084 = vld [vmem:[#allocation17 + $0x28] sm:$0xf]
    %v1085 = vld [vmem:[#allocation17 + $0x2c] sm:$0xf]
    %v1086 = vld [vmem:[#allocation17 + $0x30] sm:$0xf]
    %v1087 = vld [vmem:[#allocation17 + $0x34] sm:$0xf]
    %v1088 = vld [vmem:[#allocation17 + $0x38] sm:$0xf]
    %v1089 = vld [vmem:[#allocation17 + $0x3c] sm:$0xf]
    %v1090 = vld [vmem:[#allocation19] sm:$0x1]
    %v1092 = vlaneseq
    %v1093 = vshrl.u32 %v1092, 7
    %v1094 = vsub.s32 0, %v1093
    %v1095 = vrot.slane %v1090, %v1094
    %v1113 = vunpack.c.l.b16 %v1074
    %v1114 = vunpack.c.l.b16 %v1075
    %v1115 = vunpack.c.l.b16 %v1076
    %v1116 = vunpack.c.l.b16 %v1077
    %v1117 = vunpack.c.l.b16 %v1078
    %v1118 = vunpack.c.l.b16 %v1079
    %v1119 = vunpack.c.l.b16 %v1080
    %v1120 = vunpack.c.l.b16 %v1081
    %v1121 = vunpack.c.l.b16 %v1082
    %v1122 = vunpack.c.l.b16 %v1083
    %v1123 = vunpack.c.l.b16 %v1084
    %v1124 = vunpack.c.l.b16 %v1085
    %v1125 = vunpack.c.l.b16 %v1086
    %v1126 = vunpack.c.l.b16 %v1087
    %v1127 = vunpack.c.l.b16 %v1088
    %v1128 = vunpack.c.l.b16 %v1089
    %v1129 = vpack.c.b16 %v1114, %v1113
    %v1130 = vpack.c.b16 %v1116, %v1115
    %v1131 = vpack.c.b16 %v1118, %v1117
    %v1132 = vpack.c.b16 %v1120, %v1119
    %v1133 = vpack.c.b16 %v1122, %v1121
    %v1134 = vpack.c.b16 %v1124, %v1123
    %v1135 = vpack.c.b16 %v1126, %v1125
    %v1136 = vpack.c.b16 %v1128, %v1127
    %1145 = vmatprep.subr.bf16.mxu0 0
    %1146 = vmatpush1.bf16.msra.mxu0 %v1136
    %1147 = vmatprep.subr.bf16.mxu0 0
    %1148 = vmatpush1.bf16.msra.mxu0 %v1135
    %1149 = vmatprep.subr.bf16.mxu0 0
    %1150 = vmatpush1.bf16.msra.mxu0 %v1134
    %1151 = vmatprep.subr.bf16.mxu0 0
    %1152 = vmatpush1.bf16.msra.mxu0 %v1133
    %1153 = vmatprep.subr.bf16.mxu0 0
    %1154 = vmatpush1.bf16.msra.mxu0 %v1132
    %1155 = vmatprep.subr.bf16.mxu0 0
    %1156 = vmatpush1.bf16.msra.mxu0 %v1131
    %1157 = vmatprep.subr.bf16.mxu0 0
    %1158 = vmatpush1.bf16.msra.mxu0 %v1130
    %1159 = vmatprep.subr.bf16.mxu0 0
    %1160 = vmatpush1.bf16.msra.mxu0 %v1129
    %1161 = vmatprep.subr.bf16.mxu0 0
    %1162 = vmatpush2.bf16.msra.mxu0 0
    %1163 = vmatprep.subr.bf16.mxu0 0
    %1164 = vmatpush2.bf16.msra.mxu0 0
    %1165 = vmatprep.subr.bf16.mxu0 0
    %1166 = vmatpush2.bf16.msra.mxu0 0
    %1167 = vmatprep.subr.bf16.mxu0 0
    %1168 = vmatpush2.bf16.msra.mxu0 0
    %1169 = vmatprep.subr.bf16.mxu0 0
    %1170 = vmatpush2.bf16.msra.mxu0 0
    %1171 = vmatprep.subr.bf16.mxu0 0
    %1172 = vmatpush2.bf16.msra.mxu0 0
    %1173 = vmatprep.subr.bf16.mxu0 0
    %1174 = vmatpush2.bf16.msra.mxu0 0
    %1175 = vmatprep.subr.bf16.mxu0 0
    %1176 = vmatpush2.bf16.msra.mxu0 0
    %1177 = vmatprep.mubr.bf16.mxu0 0
    %1178 = vmatmul.mubr.bf16.gmra.mxu0 %v1072
    %v1179 = vpop.f32.mrf.mxu0
    %v1180 = vadd.f32 %v1095, %v1179
    %v1181 = vpop.f32.mrf.mxu0
    %v1182 = vpop.f32.mrf.mxu0
    %v1183 = vadd.f32 %v1095, %v1182
    %v1184 = vpop.f32.mrf.mxu0
    %1185 = vdwg.mxu0
    %vm1186 = vcmp.ge.f32.partialorder %v1180, 0.0
    %vm1187 = vcmp.ge.f32.partialorder %v1183, 0.0
    %v1188 = vstv %s1073
    %v1189 = vmul.f32 %v1188, %v1180
    %v1190 = vmul.f32 %v1188, %v1183
    %v1191 = vsel %vm1186, %v1180, %v1189
    %v1192 = vsel %vm1187, %v1183, %v1190
    %v1193 = vpack.c.bf16 %v1192, %v1191
    %v1194 = vld [vmem:[%s15] sm:$0xf]
    %v1195 = vld [vmem:[%s15 + $0x4] sm:$0xf]
    %v1196 = vld [vmem:[%s15 + $0x8] sm:$0xf]
    %v1197 = vld [vmem:[%s15 + $0xc] sm:$0xf]
    %v1198 = vld [vmem:[%s15 + $0x10] sm:$0xf]
    %v1199 = vld [vmem:[%s15 + $0x14] sm:$0xf]
    %v1200 = vld [vmem:[%s15 + $0x18] sm:$0xf]
    %v1201 = vld [vmem:[%s15 + $0x1c] sm:$0xf]
    %v1202 = vld [vmem:[%s15 + $0x20] sm:$0xf]
    %v1203 = vld [vmem:[%s15 + $0x24] sm:$0xf]
    %v1204 = vld [vmem:[%s15 + $0x28] sm:$0xf]
    %v1205 = vld [vmem:[%s15 + $0x2c] sm:$0xf]
    %v1206 = vld [vmem:[%s15 + $0x30] sm:$0xf]
    %v1207 = vld [vmem:[%s15 + $0x34] sm:$0xf]
    %v1208 = vld [vmem:[%s15 + $0x38] sm:$0xf]
    %v1209 = vld [vmem:[%s15 + $0x3c] sm:$0xf]
    %v1210 = vld [vmem:[%s16] sm:$0xf]
    %v1211 = vld [vmem:[%s16 + $0x4] sm:$0xf]
    %v1212 = vld [vmem:[%s16 + $0x8] sm:$0xf]
    %v1213 = vld [vmem:[%s16 + $0xc] sm:$0xf]
    %v1218 = vunpack.c.l.b16 %v1210
    %v1219 = vunpack.c.l.b16 %v1211
    %v1220 = vunpack.c.l.b16 %v1212
    %v1221 = vunpack.c.l.b16 %v1213
    %v1222 = vpack.c.b16 %v1219, %v1218
    %v1223 = vpack.c.b16 %v1221, %v1220
    %1226 = vmatprep.subr.bf16.mxu0 0
    %1227 = vmatpush1.bf16.msra.mxu0 0
    %1228 = vmatprep.subr.bf16.mxu0 0
    %1229 = vmatpush1.bf16.msra.mxu0 0
    %1230 = vmatprep.subr.bf16.mxu0 0
    %1231 = vmatpush1.bf16.msra.mxu0 0
    %1232 = vmatprep.subr.bf16.mxu0 0
    %1233 = vmatpush1.bf16.msra.mxu0 0
    %1234 = vmatprep.subr.bf16.mxu0 0
    %1235 = vmatpush1.bf16.msra.mxu0 0
    %1236 = vmatprep.subr.bf16.mxu0 0
    %1237 = vmatpush1.bf16.msra.mxu0 0
    %1238 = vmatprep.subr.bf16.mxu0 0
    %1239 = vmatpush1.bf16.msra.mxu0 %v1223
    %1240 = vmatprep.subr.bf16.mxu0 0
    %1241 = vmatpush1.bf16.msra.mxu0 %v1222
    %1242 = vmatprep.subr.bf16.mxu0 0
    %1243 = vmatpush2.bf16.msra.mxu0 0
    %1244 = vmatprep.subr.bf16.mxu0 0
    %1245 = vmatpush2.bf16.msra.mxu0 0
    %1246 = vmatprep.subr.bf16.mxu0 0
    %1247 = vmatpush2.bf16.msra.mxu0 0
    %1248 = vmatprep.subr.bf16.mxu0 0
    %1249 = vmatpush2.bf16.msra.mxu0 0
    %1250 = vmatprep.subr.bf16.mxu0 0
    %1251 = vmatpush2.bf16.msra.mxu0 0
    %1252 = vmatprep.subr.bf16.mxu0 0
    %1253 = vmatpush2.bf16.msra.mxu0 0
    %1254 = vmatprep.subr.bf16.mxu0 0
    %1255 = vmatpush2.bf16.msra.mxu0 0
    %1256 = vmatprep.subr.bf16.mxu0 0
    %1257 = vmatpush2.bf16.msra.mxu0 0
    %1258 = vmatprep.mubr.bf16.mxu0 0
    %1259 = vmatmul.mubr.bf16.gmra.mxu0 %v649
    %v1260 = vpop.f32.mrf.mxu0
    %v1261 = vadd.f32 0.0, %v1260
    %v1262 = vpop.f32.mrf.mxu0
    %v1263 = vpop.f32.mrf.mxu0
    %v1264 = vadd.f32 0.0, %v1263
    %v1265 = vpop.f32.mrf.mxu0
    %1266 = vdwg.mxu0
    %v1283 = vunpack.c.l.b16 %v1194
    %v1284 = vunpack.c.l.b16 %v1195
    %v1285 = vunpack.c.l.b16 %v1196
    %v1286 = vunpack.c.l.b16 %v1197
    %v1287 = vunpack.c.l.b16 %v1198
    %v1288 = vunpack.c.l.b16 %v1199
    %v1289 = vunpack.c.l.b16 %v1200
    %v1290 = vunpack.c.l.b16 %v1201
    %v1291 = vunpack.c.l.b16 %v1202
    %v1292 = vunpack.c.l.b16 %v1203
    %v1293 = vunpack.c.l.b16 %v1204
    %v1294 = vunpack.c.l.b16 %v1205
    %v1295 = vunpack.c.l.b16 %v1206
    %v1296 = vunpack.c.l.b16 %v1207
    %v1297 = vunpack.c.l.b16 %v1208
    %v1298 = vunpack.c.l.b16 %v1209
    %v1299 = vpack.c.b16 %v1284, %v1283
    %v1300 = vpack.c.b16 %v1286, %v1285
    %v1301 = vpack.c.b16 %v1288, %v1287
    %v1302 = vpack.c.b16 %v1290, %v1289
    %v1303 = vpack.c.b16 %v1292, %v1291
    %v1304 = vpack.c.b16 %v1294, %v1293
    %v1305 = vpack.c.b16 %v1296, %v1295
    %v1306 = vpack.c.b16 %v1298, %v1297
    %1315 = vmatprep.subr.bf16.mxu0 0
    %1316 = vmatpush1.bf16.msra.mxu0 %v1306
    %1317 = vmatprep.subr.bf16.mxu0 0
    %1318 = vmatpush1.bf16.msra.mxu0 %v1305
    %1319 = vmatprep.subr.bf16.mxu0 0
    %1320 = vmatpush1.bf16.msra.mxu0 %v1304
    %1321 = vmatprep.subr.bf16.mxu0 0
    %1322 = vmatpush1.bf16.msra.mxu0 %v1303
    %1323 = vmatprep.subr.bf16.mxu0 0
    %1324 = vmatpush1.bf16.msra.mxu0 %v1302
    %1325 = vmatprep.subr.bf16.mxu0 0
    %1326 = vmatpush1.bf16.msra.mxu0 %v1301
    %1327 = vmatprep.subr.bf16.mxu0 0
    %1328 = vmatpush1.bf16.msra.mxu0 %v1300
    %1329 = vmatprep.subr.bf16.mxu0 0
    %1330 = vmatpush1.bf16.msra.mxu0 %v1299
    %1331 = vmatprep.subr.bf16.mxu0 0
    %1332 = vmatpush2.bf16.msra.mxu0 0
    %1333 = vmatprep.subr.bf16.mxu0 0
    %1334 = vmatpush2.bf16.msra.mxu0 0
    %1335 = vmatprep.subr.bf16.mxu0 0
    %1336 = vmatpush2.bf16.msra.mxu0 0
    %1337 = vmatprep.subr.bf16.mxu0 0
    %1338 = vmatpush2.bf16.msra.mxu0 0
    %1339 = vmatprep.subr.bf16.mxu0 0
    %1340 = vmatpush2.bf16.msra.mxu0 0
    %1341 = vmatprep.subr.bf16.mxu0 0
    %1342 = vmatpush2.bf16.msra.mxu0 0
    %1343 = vmatprep.subr.bf16.mxu0 0
    %1344 = vmatpush2.bf16.msra.mxu0 0
    %1345 = vmatprep.subr.bf16.mxu0 0
    %1346 = vmatpush2.bf16.msra.mxu0 0
    %1347 = vmatprep.mubr.bf16.mxu0 0
    %1348 = vmatmul.mubr.bf16.gmra.mxu0 %v1193
    %v1349 = vpop.f32.mrf.mxu0
    %v1350 = vadd.f32 %v1261, %v1349
    %v1351 = vpop.f32.mrf.mxu0
    %v1352 = vpop.f32.mrf.mxu0
    %v1353 = vadd.f32 %v1264, %v1352
    %v1354 = vpop.f32.mrf.mxu0
    %1355 = vdwg.mxu0
    %v1356 = vld [vmem:[%s17] sm:$0x1]
    %v1358 = vlaneseq
    %v1359 = vshrl.u32 %v1358, 7
    %v1360 = vsub.s32 0, %v1359
    %v1361 = vrot.slane %v1356, %v1360
    %v1363 = vadd.f32 %v1350, %v1361
    %v1364 = vadd.f32 %v1353, %v1361
    %v1365 = vxor.u32 %v1363, 2147483648
    %v1366 = vxor.u32 %v1364, 2147483648
    %v1367 = vmul.f32 %v1365, 1.442695
    %v1368 = vpow.pop %v1367
    %v1369 = vmul.f32 %v1366, 1.442695
    %v1370 = vpow.pop %v1369
    %v1371 = vadd.f32 %v1368, 1.0
    %v1372 = vadd.f32 %v1370, 1.0
    %v1373 = vrcp.pop %v1371
    %v1374 = vmul.f32 1.0, %v1373
    %v1375 = vrcp.pop %v1372
    %v1376 = vmul.f32 1.0, %v1375
    %1379 = vrot.lane.b32.xlu0 %v1374, 124
    %v1380 = vpop.permute.xlu0 %1379
    %1381 = vrot.lane.b32.xlu0 %v1376, 124
    %v1382 = vpop.permute.xlu0 %1381
    %v1385 = vmul.f32 %v1363, %v1380
    %v1386 = vmul.f32 %v1364, %v1382
    %1387 = vset.pattern.permute.xlu0 4
    %1388 = vperm.xlu0 %1387, %v213
    %v1389 = vpop.permute.xlu0 %1388
    %1391 = vset.pattern.permute.xlu0 4
    %1392 = vperm.xlu0 %1391, %v214
    %v1393 = vpop.permute.xlu0 %1392
    %v1395 = vmul.f32 %v1389, %v1385
    %v1396 = vmul.f32 %v1393, %v1386
    %v1397 = vadd.f32 %v213, %v1395
    %v1398 = vadd.f32 %v214, %v1396
    %1399 = vst.msk [vmem:[%s19] sm:$0xff] %vm223, %v1397
    %1400 = vst.msk [vmem:[%s19 + $0x8] sm:$0xff] %vm223, %v1398
    // Predicated region
    $region126: #{tpu_custom_call.1} parent=1 // pred_check
      _
    $region127: #{tpu_custom_call.1} parent=1 // pred_check_branch
      %1402 = sbr.rel (0) target = $region129
    $region128: #{tpu_custom_call.1} parent=1 // pred_region
      _
    $region129: #{tpu_custom_call.1} parent=1 // pred_fallthru
      _
    // Predicated region
    $region130: #{tpu_custom_call.1} parent=1 // pred_check
      _
    $region131: #{tpu_custom_call.1} parent=1 // pred_check_branch
      %1404 = sbr.rel (0) target = $region133
    $region132: #{tpu_custom_call.1} parent=1 // pred_region
      _
    $region133: #{tpu_custom_call.1} parent=1 // pred_fallthru
      _
    %1405 = vsyncpa [#allocation3], 1
    %1406 = vsyncpa [#allocation6], 1
    %1407 = vsyncpa [#allocation9], 1
    %1408 = vsyncpa [#allocation12], 1
    %1409 = vsyncpa [#allocation15], 1
    %1410 = vsyncpa [#allocation18], 1
    %1411 = vsyncpa [#allocation4], 1

</llo_original>
